<compile_context>
chip_gen: v6e
topology: v6e:2x2x1
jax: 0.10.0
libtpu: 0.0.40
codegen_flags: <defaults>
</compile_context>

<pallas_src>
import numpy as np
import jax
import jax.numpy as jnp
from jax.experimental import pallas as pl
from jax.experimental.pallas import tpu as pltpu

EPS = 1e-5
_VMEM_LIMIT = 32 * 1024 * 1024   # explicit scoped-VMEM budget (fits v5e..v7x)


# --------------------------------------------------------------------------------------
# Kernels
# --------------------------------------------------------------------------------------
def bn_stats_kernel(x_ref, s_ref):
    """Per-block partial (sum, sum-of-squares) over the rows of a lane-packed (R, W*C) slab.

    Emits an independent (2, W*C) partial per grid step ("parallel" axis, no revisited
    accumulator / masked read-modify-write); the tiny cross-block + per-channel fold is
    done in plain JAX.
    """
    x = x_ref[...].astype(jnp.float32)
    s_ref[...] = jnp.concatenate(
        [jnp.sum(x, axis=0, keepdims=True),
         jnp.sum(x * x, axis=0, keepdims=True)], axis=0)


def make_bn_conv_relu_kernel(H, emit_stats):
    """Fused (folded-BN -> 3x3 SAME conv -> ReLU) on a (B*H, W*Cin) row-block.

    The conv is three accumulating MXU matmuls (one per dy tap), K = W*Cin each; the dx
    taps and the zero padding along W live in the banded weights.  The dy halo is a
    sublane pltpu.roll (XLU) plus a sample-boundary mask (VPU select).  If `emit_stats`,
    also writes per-block (sum, sum-sq) of the f32 ReLU result so the next stage's BN
    statistics need no extra HBM pass over the intermediate.
    """
    def kernel(x_ref, scale_ref, shift_ref, w_ref, *out_refs):
        o_ref = out_refs[0]
        BH, WCin = x_ref.shape

        # Folded BatchNorm: one mul + one add per element (f32).
        y = x_ref[...].astype(jnp.float32) * scale_ref[...] + shift_ref[...]

        # dy halo: rotate rows by +-1 and zero rows that crossed a sample boundary
        # (this is the SAME zero padding along H).
        row = jax.lax.broadcasted_iota(jnp.int32, (BH, WCin), 0)
        up = jnp.where(row % H != 0, pltpu.roll(y, 1, axis=0), 0.0)            # row h-1
        down = jnp.where(row % H != H - 1, pltpu.roll(y, BH - 1, axis=0), 0.0)  # row h+1

        # Three accumulating MXU matmuls (bf16 operands, f32 accumulation).
        acc = jnp.dot(up.astype(jnp.bfloat16), w_ref[0],
                      preferred_element_type=jnp.float32)
        acc += jnp.dot(y.astype(jnp.bfloat16), w_ref[1],
                       preferred_element_type=jnp.float32)
        acc += jnp.dot(down.astype(jnp.bfloat16), w_ref[2],
                       preferred_element_type=jnp.float32)

        out = jnp.maximum(acc, 0.0)
        o_ref[...] = out.astype(o_ref.dtype)       # W*Cout multiple of 128 -> lane-dense vst

        if emit_stats:
            s_ref = out_refs[1]
            s_ref[...] = jnp.concatenate(
                [jnp.sum(out, axis=0, keepdims=True),
                 jnp.sum(out * out, axis=0, keepdims=True)], axis=0)

    return kernel


# --------------------------------------------------------------------------------------
# Host-side parameter repacking (built ONCE, outside the jitted forward)
# --------------------------------------------------------------------------------------
def build_banded_dy_weights(w_oihw, W):
    """Repack (Cout, Cin, 3, 3) conv weights into (3, W*Cin, W*Cout) per-dy banded bf16
    matmul matrices.  Rows are (w_in, ci), columns (w_out, co); weight[co, ci, dy, dx]
    lands where w_in == w_out + dx - 1, and the missing bands at the W borders implement
    the SAME zero padding along W for free.  Pure host-side repacking (O(W^2) cost), so
    it must be hoisted out of the per-call path for fixed weights."""
    w = np.asarray(jax.device_get(w_oihw)).astype(np.float32)
    Cout, Cin, KH, KW = w.shape
    mats = np.zeros((KH, W * Cin, W * Cout), np.float32)
    for dy in range(KH):
        for dx in range(KW):
            tap = w[:, :, dy, dx].T                       # (Cin, Cout)
            for wo in range(W):
                wi = wo + dx - 1
                if 0 <= wi < W:
                    mats[dy, wi * Cin:(wi + 1) * Cin, wo * Cout:(wo + 1) * Cout] = tap
    # TODO(synk): for large W/C, column-block this matrix (multiples of 128 lanes) before
    # it approaches the v7x 64 MiB VMEM budget.
    return jnp.asarray(mats, jnp.bfloat16)


# --------------------------------------------------------------------------------------
# Wrapper glue
# --------------------------------------------------------------------------------------
def _pick_samples_per_block(N, H, target_rows=256):
    """Samples per grid step: aim for >= 256 MXU rows per matmul (>=128 on v5e).
    On v7x (2 TCs) one would additionally cap at N//2 so >=2 'parallel' steps remain."""
    b = max(1, min(N, max(1, target_rows // max(H, 1))))
    while N % b:
        b -= 1
    return b


def _fold_stats(partials, C, count):
    """(G, 2, W*C) per-block partials -> per-channel (mean, biased var clamped >= 0)."""
    s = partials.sum(axis=0)                    # (2, W*C)
    s = s.reshape(2, -1, C).sum(axis=1)         # (2, C)  (lane layout is (w, c), c fastest)
    mean = s[0] / count
    var = jnp.maximum(s[1] / count - mean * mean, 0.0)   # single-pass var can dip < 0
    return mean, var


def _fold_bn(gamma, beta, mean, var, W):
    scale = gamma * jax.lax.rsqrt(var + EPS)
    shift = beta - mean * scale
    return (jnp.tile(scale, W).reshape(1, -1).astype(jnp.float32),
            jnp.tile(shift, W).reshape(1, -1).astype(jnp.float32))


def _input_bn_stats(x_p, rows_per_block):
    R, WC = x_p.shape
    G = R // rows_per_block
    return pl.pallas_call(
        bn_stats_kernel,
        out_shape=jax.ShapeDtypeStruct((G, 2, WC), jnp.float32),
        grid=(G,),
        in_specs=[pl.BlockSpec((rows_per_block, WC), lambda i: (i, 0))],
        out_specs=pl.BlockSpec((None, 2, WC), lambda i: (i, 0, 0)),
        compiler_params=pltpu.CompilerParams(
            dimension_semantics=("parallel",),
            vmem_limit_bytes=_VMEM_LIMIT),
    )(x_p)


def _bn_conv_relu_stage(x_p, scale_f, shift_f, wmats, H, rows_per_block,
                        out_dtype, emit_stats):
    R, WC_in = x_p.shape
    WC_out = wmats.shape[-1]
    G = R // rows_per_block

    out_shape = [jax.ShapeDtypeStruct((R, WC_out), out_dtype)]
    out_specs = [pl.BlockSpec((rows_per_block, WC_out), lambda i: (i, 0))]
    if emit_stats:
        out_shape.append(jax.ShapeDtypeStruct((G, 2, WC_out), jnp.float32))
        out_specs.append(pl.BlockSpec((None, 2, WC_out), lambda i: (i, 0, 0)))

    res = pl.pallas_call(
        make_bn_conv_relu_kernel(H, emit_stats),
        out_shape=tuple(out_shape),
        grid=(G,),
        in_specs=[pl.BlockSpec((rows_per_block, WC_in), lambda i: (i, 0)),
                  pl.BlockSpec((1, WC_in), lambda i: (0, 0)),
                  pl.BlockSpec((1, WC_in), lambda i: (0, 0)),
                  pl.BlockSpec((3, WC_in, WC_out), lambda i: (0, 0, 0))],
        out_specs=tuple(out_specs),
        compiler_params=pltpu.CompilerParams(
            dimension_semantics=("parallel",),   # independent row-blocks (megacore on v7x)
            vmem_limit_bytes=_VMEM_LIMIT),
    )(x_p, scale_f, shift_f, wmats)

    return (res[0], res[1]) if emit_stats else (res[0], None)


@jax.jit
def convblock_forward(x_nchw, g1, b1, wm1, g2, b2, wm2):
    N, Cin, H, W = x_nchw.shape
    Cout = g2.shape[0]
    rows_per_block = _pick_samples_per_block(N, H) * H
    count = jnp.float32(N * H * W)

    # Layout glue: NCHW -> lane-packed (N*H, W*C); channel is the fastest lane index.
    x_p = jnp.transpose(x_nchw, (0, 2, 3, 1)).reshape(N * H, W * Cin).astype(jnp.float32)

    # Stage-1 BN statistics (single Pallas pass over x; cannot be fused -- BN needs the
    # global batch statistics before the first conv touches the data).
    mean1, var1 = _fold_stats(_input_bn_stats(x_p, rows_per_block), Cin, count)
    scale1, shift1 = _fold_bn(g1, b1, mean1, var1, W)

    # Stage 1: BN -> conv3x3 -> ReLU, intermediate kept in bf16; the stage-2 BN partial
    # statistics are fused into this kernel (no extra HBM pass over y1).
    y1, p2 = _bn_conv_relu_stage(x_p, scale1, shift1, wm1, H, rows_per_block,
                                 out_dtype=jnp.bfloat16, emit_stats=True)
    mean2, var2 = _fold_stats(p2, Cout, count)
    scale2, shift2 = _fold_bn(g2, b2, mean2, var2, W)

    # Stage 2: BN -> conv3x3 -> ReLU, f32 output.
    y2, _ = _bn_conv_relu_stage(y1, scale2, shift2, wm2, H, rows_per_block,
                                out_dtype=jnp.float32, emit_stats=False)

    # TODO(synk): PyTorch training-mode BatchNorm also updates running_mean/running_var
    # module buffers; that stateful side effect has no forward-output equivalent here.
    return jnp.transpose(y2.reshape(N, H, W, Cout), (0, 3, 1, 2))


def convblock_pallas(x, g1, b1, w1, g2, b2, w2):
    """Convenience wrapper taking raw OIHW conv weights (repacks on host per call; for
    fixed weights build the banded matrices once and call convblock_forward directly)."""
    W = x.shape[3]
    return convblock_forward(x, g1, b1, build_banded_dy_weights(w1, W),
                             g2, b2, build_banded_dy_weights(w2, W))


# --------------------------------------------------------------------------------------
# Pure-JAX reference (training-mode BN with biased variance, SAME 3x3 conv, all f32)
# --------------------------------------------------------------------------------------
def convblock_ref(x, g1, b1, w1, g2, b2, w2):
    def bn(y, g, b):
        mean = jnp.mean(y, axis=(0, 2, 3), keepdims=True)
        var = jnp.mean((y - mean) ** 2, axis=(0, 2, 3), keepdims=True)
        return (y - mean) * jax.lax.rsqrt(var + EPS) * g.reshape(1, -1, 1, 1) \
               + b.reshape(1, -1, 1, 1)

    def conv(y, w):
        return jax.lax.conv_general_dilated(
            y, w, window_strides=(1, 1), padding="SAME",
            dimension_numbers=("NCHW", "OIHW", "NCHW"))

    y = jnp.maximum(conv(bn(x, g1, b1), w1), 0.0)
    y = jnp.maximum(conv(bn(y, g2, b2), w2), 0.0)
    return y


if __name__ == "__main__":
    N, Cin, Cout, H, W = 2, 4, 8, 16, 16

    key = jax.random.PRNGKey(0)
    kx, kw1, kw2, kg1, kb1, kg2, kb2 = jax.random.split(key, 7)

    x = jax.random.normal(kx, (N, Cin, H, W), jnp.float32)
    w1 = jax.random.normal(kw1, (Cout, Cin, 3, 3), jnp.float32) * 0.1
    w2 = jax.random.normal(kw2, (Cout, Cout, 3, 3), jnp.float32) * 0.1
    g1 = 1.0 + 0.1 * jax.random.normal(kg1, (Cin,), jnp.float32)
    b1 = 0.1 * jax.random.normal(kb1, (Cin,), jnp.float32)
    g2 = 1.0 + 0.1 * jax.random.normal(kg2, (Cout,), jnp.float32)
    b2 = 0.1 * jax.random.normal(kb2, (Cout,), jnp.float32)

    # Banded conv-as-matmul weights are built once on the host, outside the jitted forward.
    wm1 = build_banded_dy_weights(w1, W)   # (3, W*Cin,  W*Cout) bf16
    wm2 = build_banded_dy_weights(w2, W)   # (3, W*Cout, W*Cout) bf16

    out = jax.block_until_ready(convblock_forward(x, g1, b1, wm1, g2, b2, wm2))
    ref = jax.block_until_ready(convblock_ref(x, g1, b1, w1, g2, b2, w2))

    assert out.shape == (N, Cout, H, W)
    # bf16 MXU operands + bf16-stored intermediate with f32 accumulation -> compare against
    # the all-f32 reference at bf16-level tolerance.
    np.testing.assert_allclose(np.asarray(out), np.asarray(ref), rtol=5e-2, atol=7.5e-2)

    print("KERNEL_OK")
</pallas_src>

<mosaic_0001>
module attributes {stable_mosaic.version = 11 : i64} {
  func.func @bn_stats_kernel(%arg0: i32, %arg1: memref<32x64xf32, #tpu.memory_space<vmem>>, %arg2: memref<1x2x64xf32, #tpu.memory_space<vmem>>) attributes {dimension_semantics = [#tpu.dimension_semantics<parallel>], iteration_bounds = array<i64: 1>, scalar_prefetch = 0 : i64, scratch_operands = 0 : i64, tpu.core_type = #tpu.core_type<tc>, window_params = [{transform_indices = @transform_0, window_bounds = array<i64: 32, 64>}, {transform_indices = @transform_1, window_bounds = array<i64: 1, 2, 64>}]} {
    %c0 = arith.constant 0 : index
    %c0_0 = arith.constant 0 : index
    %0 = vector.load %arg1[%c0, %c0_0] : memref<32x64xf32, #tpu.memory_space<vmem>>, vector<32x64xf32>
    %cst = arith.constant dense<0.000000e+00> : vector<64xf32>
    %1 = vector.multi_reduction <add>, %0, %cst [0] : vector<32x64xf32> to vector<64xf32>
    %2 = vector.shape_cast %1 : vector<64xf32> to vector<1x64xf32>
    %3 = arith.mulf %0, %0 : vector<32x64xf32>
    %cst_1 = arith.constant dense<0.000000e+00> : vector<64xf32>
    %4 = vector.multi_reduction <add>, %3, %cst_1 [0] : vector<32x64xf32> to vector<64xf32>
    %5 = vector.shape_cast %4 : vector<64xf32> to vector<1x64xf32>
    %6 = tpu.concatenate %2, %5 in 0 : vector<1x64xf32>, vector<1x64xf32> -> vector<2x64xf32>
    %c0_2 = arith.constant 0 : index
    %c0_3 = arith.constant 0 : index
    %c0_4 = arith.constant 0 : index
    %7 = vector.load %arg2[%c0_2, %c0_3, %c0_4] : memref<1x2x64xf32, #tpu.memory_space<vmem>>, vector<1x2x64xf32>
    %8 = vector.shape_cast %7 : vector<1x2x64xf32> to vector<2x64xf32>
    %9 = vector.shape_cast %6 : vector<2x64xf32> to vector<1x2x64xf32>
    tpu.vector_store %arg2[%c0_2, %c0_3, %c0_4], %9 {strides = array<i32>} : memref<1x2x64xf32, #tpu.memory_space<vmem>>, vector<1x2x64xf32>,
    return
  }
  func.func @transform_0(%arg0: i32) -> (i32, i32) {
    %c0_i32 = arith.constant 0 : i32
    %c0_i32_0 = arith.constant 0 : i32
    return %arg0, %c0_i32 : i32, i32
  }
  func.func @transform_1(%arg0: i32) -> (i32, i32, i32) {
    %c0_i32 = arith.constant 0 : i32
    %c0_i32_0 = arith.constant 0 : i32
    %c0_i32_1 = arith.constant 0 : i32
    return %arg0, %c0_i32, %c0_i32_0 : i32, i32, i32
  }
}

module attributes {stable_mosaic.version = 11 : i64} {
  func.func @kernel(%arg0: i32, %arg1: memref<32x64xf32, #tpu.memory_space<vmem>>, %arg2: memref<1x64xf32, #tpu.memory_space<vmem>>, %arg3: memref<1x64xf32, #tpu.memory_space<vmem>>, %arg4: memref<3x64x128xbf16, #tpu.memory_space<vmem>>, %arg5: memref<32x128xbf16, #tpu.memory_space<vmem>>, %arg6: memref<1x2x128xf32, #tpu.memory_space<vmem>>) attributes {dimension_semantics = [#tpu.dimension_semantics<parallel>], iteration_bounds = array<i64: 1>, scalar_prefetch = 0 : i64, scratch_operands = 0 : i64, tpu.core_type = #tpu.core_type<tc>, window_params = [{transform_indices = @transform_0, window_bounds = array<i64: 32, 64>}, {pipeline_mode = #tpu.pipeline_mode<synchronous>, transform_indices = @transform_1, window_bounds = array<i64: 1, 64>}, {pipeline_mode = #tpu.pipeline_mode<synchronous>, transform_indices = @transform_2, window_bounds = array<i64: 1, 64>}, {pipeline_mode = #tpu.pipeline_mode<synchronous>, transform_indices = @transform_3, window_bounds = array<i64: 3, 64, 128>}, {transform_indices = @transform_4, window_bounds = array<i64: 32, 128>}, {transform_indices = @transform_5, window_bounds = array<i64: 1, 2, 128>}]} {
    %c0 = arith.constant 0 : index
    %c0_0 = arith.constant 0 : index
    %0 = vector.load %arg1[%c0, %c0_0] : memref<32x64xf32, #tpu.memory_space<vmem>>, vector<32x64xf32>
    %c0_1 = arith.constant 0 : index
    %c0_2 = arith.constant 0 : index
    %1 = vector.load %arg2[%c0_1, %c0_2] : memref<1x64xf32, #tpu.memory_space<vmem>>, vector<1x64xf32>
    %2 = vector.broadcast %1 : vector<1x64xf32> to vector<32x64xf32>
    %3 = arith.mulf %0, %2 : vector<32x64xf32>
    %c0_3 = arith.constant 0 : index
    %c0_4 = arith.constant 0 : index
    %4 = vector.load %arg3[%c0_3, %c0_4] : memref<1x64xf32, #tpu.memory_space<vmem>>, vector<1x64xf32>
    %5 = vector.broadcast %4 : vector<1x64xf32> to vector<32x64xf32>
    %6 = arith.addf %3, %5 : vector<32x64xf32>
    %7 = tpu.iota {dimensions = array<i32: 0>} : vector<32x64xi32>
    %c16_i32 = arith.constant 16 : i32
    %c0_i32 = arith.constant 0 : i32
    %8 = arith.cmpi eq, %c16_i32, %c0_i32 : i32
    %c1_i32 = arith.constant 1 : i32
    %9 = arith.select %8, %c1_i32, %c16_i32 : i32
    %10 = vector.broadcast %9 : i32 to vector<32x64xi32>
    %11 = arith.remsi %7, %10 : vector<32x64xi32>
    %c0_i32_5 = arith.constant 0 : i32
    %12 = vector.broadcast %c0_i32_5 : i32 to vector<32x64xi32>
    %13 = arith.cmpi ne, %11, %12 : vector<32x64xi32>
    %c0_i32_6 = arith.constant 0 : i32
    %14 = vector.broadcast %c0_i32_6 : i32 to vector<32x64xi32>
    %15 = arith.cmpi slt, %11, %14 : vector<32x64xi32>
    %c0_i32_7 = arith.constant 0 : i32
    %16 = arith.cmpi slt, %9, %c0_i32_7 : i32
    %17 = vector.broadcast %16 : i1 to vector<32x64xi1>
    %18 = vector.broadcast %17 : vector<32x64xi1> to vector<32x64xi1>
    %19 = arith.xori %15, %18 : vector<32x64xi1>
    %20 = arith.andi %19, %13 : vector<32x64xi1>
    %21 = vector.broadcast %9 : i32 to vector<32x64xi32>
    %22 = arith.addi %11, %21 : vector<32x64xi32>
    %23 = arith.select %20, %22, %11 : vector<32x64xi1>, vector<32x64xi32>
    %c0_i32_8 = arith.constant 0 : i32
    %24 = vector.broadcast %c0_i32_8 : i32 to vector<32x64xi32>
    %25 = arith.cmpi ne, %23, %24 : vector<32x64xi32>
    %c1_i32_9 = arith.constant 1 : i32
    %26 = tpu.dynamic_rotate %6 by %c1_i32_9 dim 0 : vector<32x64xf32>, i32 -> vector<32x64xf32>
    %cst = arith.constant 0.000000e+00 : f32
    %27 = vector.broadcast %cst : f32 to vector<32x64xf32>
    %28 = arith.select %25, %26, %27 : vector<32x64xi1>, vector<32x64xf32>
    %c16_i32_10 = arith.constant 16 : i32
    %c0_i32_11 = arith.constant 0 : i32
    %29 = arith.cmpi eq, %c16_i32_10, %c0_i32_11 : i32
    %c1_i32_12 = arith.constant 1 : i32
    %30 = arith.select %29, %c1_i32_12, %c16_i32_10 : i32
    %31 = vector.broadcast %30 : i32 to vector<32x64xi32>
    %32 = arith.remsi %7, %31 : vector<32x64xi32>
    %c0_i32_13 = arith.constant 0 : i32
    %33 = vector.broadcast %c0_i32_13 : i32 to vector<32x64xi32>
    %34 = arith.cmpi ne, %32, %33 : vector<32x64xi32>
    %c0_i32_14 = arith.constant 0 : i32
    %35 = vector.broadcast %c0_i32_14 : i32 to vector<32x64xi32>
    %36 = arith.cmpi slt, %32, %35 : vector<32x64xi32>
    %c0_i32_15 = arith.constant 0 : i32
    %37 = arith.cmpi slt, %30, %c0_i32_15 : i32
    %38 = vector.broadcast %37 : i1 to vector<32x64xi1>
    %39 = vector.broadcast %38 : vector<32x64xi1> to vector<32x64xi1>
    %40 = arith.xori %36, %39 : vector<32x64xi1>
    %41 = arith.andi %40, %34 : vector<32x64xi1>
    %42 = vector.broadcast %30 : i32 to vector<32x64xi32>
    %43 = arith.addi %32, %42 : vector<32x64xi32>
    %44 = arith.select %41, %43, %32 : vector<32x64xi1>, vector<32x64xi32>
    %c15_i32 = arith.constant 15 : i32
    %45 = vector.broadcast %c15_i32 : i32 to vector<32x64xi32>
    %46 = arith.cmpi ne, %44, %45 : vector<32x64xi32>
    %c31_i32 = arith.constant 31 : i32
    %47 = tpu.dynamic_rotate %6 by %c31_i32 dim 0 : vector<32x64xf32>, i32 -> vector<32x64xf32>
    %cst_16 = arith.constant 0.000000e+00 : f32
    %48 = vector.broadcast %cst_16 : f32 to vector<32x64xf32>
    %49 = arith.select %46, %47, %48 : vector<32x64xi1>, vector<32x64xf32>
    %50 = arith.truncf %28 : vector<32x64xf32> to vector<32x64xbf16>
    %c0_17 = arith.constant 0 : index
    %c0_18 = arith.constant 0 : index
    %c0_19 = arith.constant 0 : index
    %51 = vector.load %arg4[%c0_17, %c0_18, %c0_19] : memref<3x64x128xbf16, #tpu.memory_space<vmem>>, vector<1x64x128xbf16>
    %52 = vector.shape_cast %51 : vector<1x64x128xbf16> to vector<64x128xbf16>
    %cst_20 = arith.constant dense<0.000000e+00> : vector<32x128xf32>
    %53 = tpu.matmul %50, %52, %cst_20 {dimension_numbers = #tpu.dot_dimension_numbers<[1], [0], [0], [1], [0, 0, 1, 1], [], []>} : vector<32x64xbf16>, vector<64x128xbf16>, vector<32x128xf32> -> vector<32x128xf32>
    %54 = arith.truncf %6 : vector<32x64xf32> to vector<32x64xbf16>
    %c1 = arith.constant 1 : index
    %c0_21 = arith.constant 0 : index
    %c0_22 = arith.constant 0 : index
    %55 = vector.load %arg4[%c1, %c0_21, %c0_22] : memref<3x64x128xbf16, #tpu.memory_space<vmem>>, vector<1x64x128xbf16>
    %56 = vector.shape_cast %55 : vector<1x64x128xbf16> to vector<64x128xbf16>
    %cst_23 = arith.constant dense<0.000000e+00> : vector<32x128xf32>
    %57 = tpu.matmul %54, %56, %cst_23 {dimension_numbers = #tpu.dot_dimension_numbers<[1], [0], [0], [1], [0, 0, 1, 1], [], []>} : vector<32x64xbf16>, vector<64x128xbf16>, vector<32x128xf32> -> vector<32x128xf32>
    %58 = arith.addf %53, %57 : vector<32x128xf32>
    %59 = arith.truncf %49 : vector<32x64xf32> to vector<32x64xbf16>
    %c2 = arith.constant 2 : index
    %c0_24 = arith.constant 0 : index
    %c0_25 = arith.constant 0 : index
    %60 = vector.load %arg4[%c2, %c0_24, %c0_25] : memref<3x64x128xbf16, #tpu.memory_space<vmem>>, vector<1x64x128xbf16>
    %61 = vector.shape_cast %60 : vector<1x64x128xbf16> to vector<64x128xbf16>
    %cst_26 = arith.constant dense<0.000000e+00> : vector<32x128xf32>
    %62 = tpu.matmul %59, %61, %cst_26 {dimension_numbers = #tpu.dot_dimension_numbers<[1], [0], [0], [1], [0, 0, 1, 1], [], []>} : vector<32x64xbf16>, vector<64x128xbf16>, vector<32x128xf32> -> vector<32x128xf32>
    %63 = arith.addf %58, %62 : vector<32x128xf32>
    %cst_27 = arith.constant 0.000000e+00 : f32
    %64 = vector.broadcast %cst_27 : f32 to vector<32x128xf32>
    %65 = arith.maximumf %63, %64 : vector<32x128xf32>
    %66 = arith.truncf %65 : vector<32x128xf32> to vector<32x128xbf16>
    %c0_28 = arith.constant 0 : index
    %c0_29 = arith.constant 0 : index
    %67 = vector.load %arg5[%c0_28, %c0_29] : memref<32x128xbf16, #tpu.memory_space<vmem>>, vector<32x128xbf16>
    tpu.vector_store %arg5[%c0_28, %c0_29], %66 {strides = array<i32>} : memref<32x128xbf16, #tpu.memory_space<vmem>>, vector<32x128xbf16>,
    %cst_30 = arith.constant dense<0.000000e+00> : vector<128xf32>
    %68 = vector.multi_reduction <add>, %65, %cst_30 [0] : vector<32x128xf32> to vector<128xf32>
    %69 = vector.shape_cast %68 : vector<128xf32> to vector<1x128xf32>
    %70 = arith.mulf %65, %65 : vector<32x128xf32>
    %cst_31 = arith.constant dense<0.000000e+00> : vector<128xf32>
    %71 = vector.multi_reduction <add>, %70, %cst_31 [0] : vector<32x128xf32> to vector<128xf32>
    %72 = vector.shape_cast %71 : vector<128xf32> to vector<1x128xf32>
    %73 = tpu.concatenate %69, %72 in 0 : vector<1x128xf32>, vector<1x128xf32> -> vector<2x128xf32>
    %c0_32 = arith.constant 0 : index
    %c0_33 = arith.constant 0 : index
    %c0_34 = arith.constant 0 : index
    %74 = vector.load %arg6[%c0_32, %c0_33, %c0_34] : memref<1x2x128xf32, #tpu.memory_space<vmem>>, vector<1x2x128xf32>
    %75 = vector.shape_cast %74 : vector<1x2x128xf32> to vector<2x128xf32>
    %76 = vector.shape_cast %73 : vector<2x128xf32> to vector<1x2x128xf32>
    tpu.vector_store %arg6[%c0_32, %c0_33, %c0_34], %76 {strides = array<i32>} : memref<1x2x128xf32, #tpu.memory_space<vmem>>, vector<1x2x128xf32>,
    return
  }
  func.func @transform_0(%arg0: i32) -> (i32, i32) {
    %c0_i32 = arith.constant 0 : i32
    %c0_i32_0 = arith.constant 0 : i32
    return %arg0, %c0_i32 : i32, i32
  }
  func.func @transform_1(%arg0: i32) -> (i32, i32) {
    %c0_i32 = arith.constant 0 : i32
    %c0_i32_0 = arith.constant 0 : i32
    %c0_i32_1 = arith.constant 0 : i32
    return %c0_i32, %c0_i32_0 : i32, i32
  }
  func.func @transform_2(%arg0: i32) -> (i32, i32) {
    %c0_i32 = arith.constant 0 : i32
    %c0_i32_0 = arith.constant 0 : i32
    %c0_i32_1 = arith.constant 0 : i32
    return %c0_i32, %c0_i32_0 : i32, i32
  }
  func.func @transform_3(%arg0: i32) -> (i32, i32, i32) {
    %c0_i32 = arith.constant 0 : i32
    %c0_i32_0 = arith.constant 0 : i32
    %c0_i32_1 = arith.constant 0 : i32
    %c0_i32_2 = arith.constant 0 : i32
    return %c0_i32, %c0_i32_0, %c0_i32_1 : i32, i32, i32
  }
  func.func @transform_4(%arg0: i32) -> (i32, i32) {
    %c0_i32 = arith.constant 0 : i32
    %c0_i32_0 = arith.constant 0 : i32
    return %arg0, %c0_i32 : i32, i32
  }
  func.func @transform_5(%arg0: i32) -> (i32, i32, i32) {
    %c0_i32 = arith.constant 0 : i32
    %c0_i32_0 = arith.constant 0 : i32
    %c0_i32_1 = arith.constant 0 : i32
    return %arg0, %c0_i32, %c0_i32_0 : i32, i32, i32
  }
}

module attributes {stable_mosaic.version = 11 : i64} {
  func.func @kernel(%arg0: i32, %arg1: memref<32x128xbf16, #tpu.memory_space<vmem>>, %arg2: memref<1x128xf32, #tpu.memory_space<vmem>>, %arg3: memref<1x128xf32, #tpu.memory_space<vmem>>, %arg4: memref<3x128x128xbf16, #tpu.memory_space<vmem>>, %arg5: memref<32x128xf32, #tpu.memory_space<vmem>>) attributes {dimension_semantics = [#tpu.dimension_semantics<parallel>], iteration_bounds = array<i64: 1>, scalar_prefetch = 0 : i64, scratch_operands = 0 : i64, tpu.core_type = #tpu.core_type<tc>, window_params = [{transform_indices = @transform_0, window_bounds = array<i64: 32, 128>}, {pipeline_mode = #tpu.pipeline_mode<synchronous>, transform_indices = @transform_1, window_bounds = array<i64: 1, 128>}, {pipeline_mode = #tpu.pipeline_mode<synchronous>, transform_indices = @transform_2, window_bounds = array<i64: 1, 128>}, {pipeline_mode = #tpu.pipeline_mode<synchronous>, transform_indices = @transform_3, window_bounds = array<i64: 3, 128, 128>}, {transform_indices = @transform_4, window_bounds = array<i64: 32, 128>}]} {
    %c0 = arith.constant 0 : index
    %c0_0 = arith.constant 0 : index
    %0 = vector.load %arg1[%c0, %c0_0] : memref<32x128xbf16, #tpu.memory_space<vmem>>, vector<32x128xbf16>
    %1 = arith.extf %0 : vector<32x128xbf16> to vector<32x128xf32>
    %c0_1 = arith.constant 0 : index
    %c0_2 = arith.constant 0 : index
    %2 = vector.load %arg2[%c0_1, %c0_2] : memref<1x128xf32, #tpu.memory_space<vmem>>, vector<1x128xf32>
    %3 = vector.broadcast %2 : vector<1x128xf32> to vector<32x128xf32>
    %4 = arith.mulf %1, %3 : vector<32x128xf32>
    %c0_3 = arith.constant 0 : index
    %c0_4 = arith.constant 0 : index
    %5 = vector.load %arg3[%c0_3, %c0_4] : memref<1x128xf32, #tpu.memory_space<vmem>>, vector<1x128xf32>
    %6 = vector.broadcast %5 : vector<1x128xf32> to vector<32x128xf32>
    %7 = arith.addf %4, %6 : vector<32x128xf32>
    %8 = tpu.iota {dimensions = array<i32: 0>} : vector<32x128xi32>
    %c16_i32 = arith.constant 16 : i32
    %c0_i32 = arith.constant 0 : i32
    %9 = arith.cmpi eq, %c16_i32, %c0_i32 : i32
    %c1_i32 = arith.constant 1 : i32
    %10 = arith.select %9, %c1_i32, %c16_i32 : i32
    %11 = vector.broadcast %10 : i32 to vector<32x128xi32>
    %12 = arith.remsi %8, %11 : vector<32x128xi32>
    %c0_i32_5 = arith.constant 0 : i32
    %13 = vector.broadcast %c0_i32_5 : i32 to vector<32x128xi32>
    %14 = arith.cmpi ne, %12, %13 : vector<32x128xi32>
    %c0_i32_6 = arith.constant 0 : i32
    %15 = vector.broadcast %c0_i32_6 : i32 to vector<32x128xi32>
    %16 = arith.cmpi slt, %12, %15 : vector<32x128xi32>
    %c0_i32_7 = arith.constant 0 : i32
    %17 = arith.cmpi slt, %10, %c0_i32_7 : i32
    %18 = vector.broadcast %17 : i1 to vector<32x128xi1>
    %19 = vector.broadcast %18 : vector<32x128xi1> to vector<32x128xi1>
    %20 = arith.xori %16, %19 : vector<32x128xi1>
    %21 = arith.andi %20, %14 : vector<32x128xi1>
    %22 = vector.broadcast %10 : i32 to vector<32x128xi32>
    %23 = arith.addi %12, %22 : vector<32x128xi32>
    %24 = arith.select %21, %23, %12 : vector<32x128xi1>, vector<32x128xi32>
    %c0_i32_8 = arith.constant 0 : i32
    %25 = vector.broadcast %c0_i32_8 : i32 to vector<32x128xi32>
    %26 = arith.cmpi ne, %24, %25 : vector<32x128xi32>
    %c1_i32_9 = arith.constant 1 : i32
    %27 = tpu.dynamic_rotate %7 by %c1_i32_9 dim 0 : vector<32x128xf32>, i32 -> vector<32x128xf32>
    %cst = arith.constant 0.000000e+00 : f32
    %28 = vector.broadcast %cst : f32 to vector<32x128xf32>
    %29 = arith.select %26, %27, %28 : vector<32x128xi1>, vector<32x128xf32>
    %c16_i32_10 = arith.constant 16 : i32
    %c0_i32_11 = arith.constant 0 : i32
    %30 = arith.cmpi eq, %c16_i32_10, %c0_i32_11 : i32
    %c1_i32_12 = arith.constant 1 : i32
    %31 = arith.select %30, %c1_i32_12, %c16_i32_10 : i32
    %32 = vector.broadcast %31 : i32 to vector<32x128xi32>
    %33 = arith.remsi %8, %32 : vector<32x128xi32>
    %c0_i32_13 = arith.constant 0 : i32
    %34 = vector.broadcast %c0_i32_13 : i32 to vector<32x128xi32>
    %35 = arith.cmpi ne, %33, %34 : vector<32x128xi32>
    %c0_i32_14 = arith.constant 0 : i32
    %36 = vector.broadcast %c0_i32_14 : i32 to vector<32x128xi32>
    %37 = arith.cmpi slt, %33, %36 : vector<32x128xi32>
    %c0_i32_15 = arith.constant 0 : i32
    %38 = arith.cmpi slt, %31, %c0_i32_15 : i32
    %39 = vector.broadcast %38 : i1 to vector<32x128xi1>
    %40 = vector.broadcast %39 : vector<32x128xi1> to vector<32x128xi1>
    %41 = arith.xori %37, %40 : vector<32x128xi1>
    %42 = arith.andi %41, %35 : vector<32x128xi1>
    %43 = vector.broadcast %31 : i32 to vector<32x128xi32>
    %44 = arith.addi %33, %43 : vector<32x128xi32>
    %45 = arith.select %42, %44, %33 : vector<32x128xi1>, vector<32x128xi32>
    %c15_i32 = arith.constant 15 : i32
    %46 = vector.broadcast %c15_i32 : i32 to vector<32x128xi32>
    %47 = arith.cmpi ne, %45, %46 : vector<32x128xi32>
    %c31_i32 = arith.constant 31 : i32
    %48 = tpu.dynamic_rotate %7 by %c31_i32 dim 0 : vector<32x128xf32>, i32 -> vector<32x128xf32>
    %cst_16 = arith.constant 0.000000e+00 : f32
    %49 = vector.broadcast %cst_16 : f32 to vector<32x128xf32>
    %50 = arith.select %47, %48, %49 : vector<32x128xi1>, vector<32x128xf32>
    %51 = arith.truncf %29 : vector<32x128xf32> to vector<32x128xbf16>
    %c0_17 = arith.constant 0 : index
    %c0_18 = arith.constant 0 : index
    %c0_19 = arith.constant 0 : index
    %52 = vector.load %arg4[%c0_17, %c0_18, %c0_19] : memref<3x128x128xbf16, #tpu.memory_space<vmem>>, vector<1x128x128xbf16>
    %53 = vector.shape_cast %52 : vector<1x128x128xbf16> to vector<128x128xbf16>
    %cst_20 = arith.constant dense<0.000000e+00> : vector<32x128xf32>
    %54 = tpu.matmul %51, %53, %cst_20 {dimension_numbers = #tpu.dot_dimension_numbers<[1], [0], [0], [1], [0, 0, 1, 1], [], []>} : vector<32x128xbf16>, vector<128x128xbf16>, vector<32x128xf32> -> vector<32x128xf32>
    %55 = arith.truncf %7 : vector<32x128xf32> to vector<32x128xbf16>
    %c1 = arith.constant 1 : index
    %c0_21 = arith.constant 0 : index
    %c0_22 = arith.constant 0 : index
    %56 = vector.load %arg4[%c1, %c0_21, %c0_22] : memref<3x128x128xbf16, #tpu.memory_space<vmem>>, vector<1x128x128xbf16>
    %57 = vector.shape_cast %56 : vector<1x128x128xbf16> to vector<128x128xbf16>
    %cst_23 = arith.constant dense<0.000000e+00> : vector<32x128xf32>
    %58 = tpu.matmul %55, %57, %cst_23 {dimension_numbers = #tpu.dot_dimension_numbers<[1], [0], [0], [1], [0, 0, 1, 1], [], []>} : vector<32x128xbf16>, vector<128x128xbf16>, vector<32x128xf32> -> vector<32x128xf32>
    %59 = arith.addf %54, %58 : vector<32x128xf32>
    %60 = arith.truncf %50 : vector<32x128xf32> to vector<32x128xbf16>
    %c2 = arith.constant 2 : index
    %c0_24 = arith.constant 0 : index
    %c0_25 = arith.constant 0 : index
    %61 = vector.load %arg4[%c2, %c0_24, %c0_25] : memref<3x128x128xbf16, #tpu.memory_space<vmem>>, vector<1x128x128xbf16>
    %62 = vector.shape_cast %61 : vector<1x128x128xbf16> to vector<128x128xbf16>
    %cst_26 = arith.constant dense<0.000000e+00> : vector<32x128xf32>
    %63 = tpu.matmul %60, %62, %cst_26 {dimension_numbers = #tpu.dot_dimension_numbers<[1], [0], [0], [1], [0, 0, 1, 1], [], []>} : vector<32x128xbf16>, vector<128x128xbf16>, vector<32x128xf32> -> vector<32x128xf32>
    %64 = arith.addf %59, %63 : vector<32x128xf32>
    %cst_27 = arith.constant 0.000000e+00 : f32
    %65 = vector.broadcast %cst_27 : f32 to vector<32x128xf32>
    %66 = arith.maximumf %64, %65 : vector<32x128xf32>
    %c0_28 = arith.constant 0 : index
    %c0_29 = arith.constant 0 : index
    %67 = vector.load %arg5[%c0_28, %c0_29] : memref<32x128xf32, #tpu.memory_space<vmem>>, vector<32x128xf32>
    tpu.vector_store %arg5[%c0_28, %c0_29], %66 {strides = array<i32>} : memref<32x128xf32, #tpu.memory_space<vmem>>, vector<32x128xf32>,
    return
  }
  func.func @transform_0(%arg0: i32) -> (i32, i32) {
    %c0_i32 = arith.constant 0 : i32
    %c0_i32_0 = arith.constant 0 : i32
    return %arg0, %c0_i32 : i32, i32
  }
  func.func @transform_1(%arg0: i32) -> (i32, i32) {
    %c0_i32 = arith.constant 0 : i32
    %c0_i32_0 = arith.constant 0 : i32
    %c0_i32_1 = arith.constant 0 : i32
    return %c0_i32, %c0_i32_0 : i32, i32
  }
  func.func @transform_2(%arg0: i32) -> (i32, i32) {
    %c0_i32 = arith.constant 0 : i32
    %c0_i32_0 = arith.constant 0 : i32
    %c0_i32_1 = arith.constant 0 : i32
    return %c0_i32, %c0_i32_0 : i32, i32
  }
  func.func @transform_3(%arg0: i32) -> (i32, i32, i32) {
    %c0_i32 = arith.constant 0 : i32
    %c0_i32_0 = arith.constant 0 : i32
    %c0_i32_1 = arith.constant 0 : i32
    %c0_i32_2 = arith.constant 0 : i32
    return %c0_i32, %c0_i32_0, %c0_i32_1 : i32, i32, i32
  }
  func.func @transform_4(%arg0: i32) -> (i32, i32) {
    %c0_i32 = arith.constant 0 : i32
    %c0_i32_0 = arith.constant 0 : i32
    return %arg0, %c0_i32 : i32, i32
  }
}

</mosaic_0001>

<llo_original>
// kernel: tile.28
$region0: #{tile.28}
  #allocation0 [shape = 's32[1]{0}', space=sflag, size = 0x4, scoped, tag = 'scoped memory for tile.28']
  %s0 = inlined_call_operand.vmem [shape: f32[4], index: 0, kind: input, shape index: {}]
  %s1 = inlined_call_operand.vmem [shape: f32[16,4], index: 1, kind: output, shape index: {}]
  // Predicated region
  $region2: #{tile.28} parent=0 // pred_check
    _
  $region3: #{tile.28} parent=0 // pred_check_branch
    %3 = sbr.rel (0) target = $region5
  $region4: #{tile.28} parent=0 // pred_region
    _
  $region5: #{tile.28} parent=0 // pred_fallthru
    _
  %v4 = vld [vmem:[%s0] ss:$0 sm:$0xff]
  %5 = vst [vmem:[%s1] sm:$0xff] %v4
  %s6 = scalar_lea.vmem %s1, 8
  %7 = vst [vmem:[%s6] sm:$0xff] %v4

// kernel: tile.29
$region0: #{tile.29}
  %s0 = inlined_call_operand.vmem [shape: f32[16,4], index: 0, kind: input, shape index: {}]
  %s1 = inlined_call_operand.vmem [shape: f32[1,64], index: 1, kind: output, shape index: {}]
  $region1: #{tile.29} parent=0
    #allocation0 [shape = 'u8[4096]{0}', space=vmem, size = 0x1000, scoped, tag = 'scoped mem for output reshape']
    %v2 = vld [vmem:[%s0] sm:$0x1]
    %vm3 = vcmask 31744
    %4 = vst.msk [vmem:[#allocation0] sm:$0x1] %vm3, %v2
    %s5 = scalar_lea.vmem %s0, 15
    %v6 = vld [vmem:[%s5] sm:$0x1]
    %7 = vrot.lane.b32.xlu0 %v6, 60
    %v8 = vpop.permute.xlu0 %7
    %vm9 = vcmask 523744
    %10 = vst.msk [vmem:[#allocation0] sm:$0x1] %vm9, %v8
    %s11 = scalar_lea.vmem %s0, 14
    %v12 = vld [vmem:[%s11] sm:$0x1]
    %13 = vrot.lane.b32.xlu0 %v12, 56
    %v14 = vpop.permute.xlu0 %13
    %vm15 = vcmask 490944
    %16 = vst.msk [vmem:[#allocation0] sm:$0x1] %vm15, %v14
    %s17 = scalar_lea.vmem %s0, 13
    %v18 = vld [vmem:[%s17] sm:$0x1]
    %19 = vrot.lane.b32.xlu0 %v18, 52
    %v20 = vpop.permute.xlu0 %19
    %vm21 = vcmask 458144
    %22 = vst.msk [vmem:[#allocation0] sm:$0x1] %vm21, %v20
    %s23 = scalar_lea.vmem %s0, 12
    %v24 = vld [vmem:[%s23] sm:$0x1]
    %25 = vrot.lane.b32.xlu0 %v24, 48
    %v26 = vpop.permute.xlu0 %25
    %vm27 = vcmask 425344
    %28 = vst.msk [vmem:[#allocation0] sm:$0x1] %vm27, %v26
    %s29 = scalar_lea.vmem %s0, 11
    %v30 = vld [vmem:[%s29] sm:$0x1]
    %31 = vrot.lane.b32.xlu0 %v30, 44
    %v32 = vpop.permute.xlu0 %31
    %vm33 = vcmask 392544
    %34 = vst.msk [vmem:[#allocation0] sm:$0x1] %vm33, %v32
    %s35 = scalar_lea.vmem %s0, 10
    %v36 = vld [vmem:[%s35] sm:$0x1]
    %37 = vrot.lane.b32.xlu0 %v36, 40
    %v38 = vpop.permute.xlu0 %37
    %vm39 = vcmask 359744
    %40 = vst.msk [vmem:[#allocation0] sm:$0x1] %vm39, %v38
    %s41 = scalar_lea.vmem %s0, 9
    %v42 = vld [vmem:[%s41] sm:$0x1]
    %43 = vrot.lane.b32.xlu0 %v42, 36
    %v44 = vpop.permute.xlu0 %43
    %vm45 = vcmask 326944
    %46 = vst.msk [vmem:[#allocation0] sm:$0x1] %vm45, %v44
    %s47 = scalar_lea.vmem %s0, 8
    %v48 = vld [vmem:[%s47] sm:$0x1]
    %49 = vrot.lane.b32.xlu0 %v48, 32
    %v50 = vpop.permute.xlu0 %49
    %vm51 = vcmask 294144
    %52 = vst.msk [vmem:[#allocation0] sm:$0x1] %vm51, %v50
    %s53 = scalar_lea.vmem %s0, 7
    %v54 = vld [vmem:[%s53] sm:$0x1]
    %55 = vrot.lane.b32.xlu0 %v54, 28
    %v56 = vpop.permute.xlu0 %55
    %vm57 = vcmask 261344
    %58 = vst.msk [vmem:[#allocation0] sm:$0x1] %vm57, %v56
    %s59 = scalar_lea.vmem %s0, 6
    %v60 = vld [vmem:[%s59] sm:$0x1]
    %61 = vrot.lane.b32.xlu0 %v60, 24
    %v62 = vpop.permute.xlu0 %61
    %vm63 = vcmask 228544
    %64 = vst.msk [vmem:[#allocation0] sm:$0x1] %vm63, %v62
    %s65 = scalar_lea.vmem %s0, 5
    %v66 = vld [vmem:[%s65] sm:$0x1]
    %67 = vrot.lane.b32.xlu0 %v66, 20
    %v68 = vpop.permute.xlu0 %67
    %vm69 = vcmask 195744
    %70 = vst.msk [vmem:[#allocation0] sm:$0x1] %vm69, %v68
    %s71 = scalar_lea.vmem %s0, 4
    %v72 = vld [vmem:[%s71] sm:$0x1]
    %73 = vrot.lane.b32.xlu0 %v72, 16
    %v74 = vpop.permute.xlu0 %73
    %vm75 = vcmask 162944
    %76 = vst.msk [vmem:[#allocation0] sm:$0x1] %vm75, %v74
    %s77 = scalar_lea.vmem %s0, 3
    %v78 = vld [vmem:[%s77] sm:$0x1]
    %79 = vrot.lane.b32.xlu0 %v78, 12
    %v80 = vpop.permute.xlu0 %79
    %vm81 = vcmask 130144
    %82 = vst.msk [vmem:[#allocation0] sm:$0x1] %vm81, %v80
    %s83 = scalar_lea.vmem %s0, 2
    %v84 = vld [vmem:[%s83] sm:$0x1]
    %85 = vrot.lane.b32.xlu0 %v84, 8
    %v86 = vpop.permute.xlu0 %85
    %vm87 = vcmask 97344
    %88 = vst.msk [vmem:[#allocation0] sm:$0x1] %vm87, %v86
    %s89 = scalar_lea.vmem %s0, 1
    %v90 = vld [vmem:[%s89] sm:$0x1]
    %91 = vrot.lane.b32.xlu0 %v90, 4
    %v92 = vpop.permute.xlu0 %91
    %vm93 = vcmask 64544
    %94 = vst.msk [vmem:[#allocation0] sm:$0x1] %vm93, %v92
    %s96 = sshll.u32 1, 1
    %s97 = ssub.s32 %s96, 1
    %v99 = vld [vmem:[#allocation0] sm:%s97]
    %s100 = sshll.u32 1, 1
    %s101 = ssub.s32 %s100, 1
    %102 = vst [vmem:[%s1] sm:%s101] %v99

// kernel: tile.38
$region0: #{tile.38}
  #allocation0 [shape = 's32[1]{0}', space=sflag, size = 0x4, scoped, tag = 'scoped memory for tile.38']
  %s0 = inlined_call_operand.vmem [shape: f32[8], index: 0, kind: input, shape index: {}]
  %s1 = inlined_call_operand.vmem [shape: f32[16,8], index: 1, kind: output, shape index: {}]
  // Predicated region
  $region2: #{tile.38} parent=0 // pred_check
    _
  $region3: #{tile.38} parent=0 // pred_check_branch
    %3 = sbr.rel (0) target = $region5
  $region4: #{tile.38} parent=0 // pred_region
    _
  $region5: #{tile.38} parent=0 // pred_fallthru
    _
  %v4 = vld [vmem:[%s0] ss:$0 sm:$0xff]
  %5 = vst [vmem:[%s1] sm:$0xff] %v4
  %s6 = scalar_lea.vmem %s1, 8
  %7 = vst [vmem:[%s6] sm:$0xff] %v4

// kernel: tile.39
$region0: #{tile.39}
  %s0 = inlined_call_operand.vmem [shape: f32[16,8], index: 0, kind: input, shape index: {}]
  %s1 = inlined_call_operand.vmem [shape: f32[1,128], index: 1, kind: output, shape index: {}]
  $region1: #{tile.39} parent=0
    #allocation0 [shape = 'u8[4096]{0}', space=vmem, size = 0x1000, scoped, tag = 'scoped mem for output reshape']
    %v2 = vld [vmem:[%s0] sm:$0x1]
    %vm3 = vcmask 64512
    %4 = vst.msk [vmem:[#allocation0] sm:$0x1] %vm3, %v2
    %s5 = scalar_lea.vmem %s0, 15
    %v6 = vld [vmem:[%s5] sm:$0x1]
    %7 = vrot.lane.b32.xlu0 %v6, 120
    %v8 = vpop.permute.xlu0 %7
    %vm9 = vcmask 1048512
    %10 = vst.msk [vmem:[#allocation0] sm:$0x1] %vm9, %v8
    %s11 = scalar_lea.vmem %s0, 14
    %v12 = vld [vmem:[%s11] sm:$0x1]
    %13 = vrot.lane.b32.xlu0 %v12, 112
    %v14 = vpop.permute.xlu0 %13
    %vm15 = vcmask 982912
    %16 = vst.msk [vmem:[#allocation0] sm:$0x1] %vm15, %v14
    %s17 = scalar_lea.vmem %s0, 13
    %v18 = vld [vmem:[%s17] sm:$0x1]
    %19 = vrot.lane.b32.xlu0 %v18, 104
    %v20 = vpop.permute.xlu0 %19
    %vm21 = vcmask 917312
    %22 = vst.msk [vmem:[#allocation0] sm:$0x1] %vm21, %v20
    %s23 = scalar_lea.vmem %s0, 12
    %v24 = vld [vmem:[%s23] sm:$0x1]
    %25 = vrot.lane.b32.xlu0 %v24, 96
    %v26 = vpop.permute.xlu0 %25
    %vm27 = vcmask 851712
    %28 = vst.msk [vmem:[#allocation0] sm:$0x1] %vm27, %v26
    %s29 = scalar_lea.vmem %s0, 11
    %v30 = vld [vmem:[%s29] sm:$0x1]
    %31 = vrot.lane.b32.xlu0 %v30, 88
    %v32 = vpop.permute.xlu0 %31
    %vm33 = vcmask 786112
    %34 = vst.msk [vmem:[#allocation0] sm:$0x1] %vm33, %v32
    %s35 = scalar_lea.vmem %s0, 10
    %v36 = vld [vmem:[%s35] sm:$0x1]
    %37 = vrot.lane.b32.xlu0 %v36, 80
    %v38 = vpop.permute.xlu0 %37
    %vm39 = vcmask 720512
    %40 = vst.msk [vmem:[#allocation0] sm:$0x1] %vm39, %v38
    %s41 = scalar_lea.vmem %s0, 9
    %v42 = vld [vmem:[%s41] sm:$0x1]
    %43 = vrot.lane.b32.xlu0 %v42, 72
    %v44 = vpop.permute.xlu0 %43
    %vm45 = vcmask 654912
    %46 = vst.msk [vmem:[#allocation0] sm:$0x1] %vm45, %v44
    %s47 = scalar_lea.vmem %s0, 8
    %v48 = vld [vmem:[%s47] sm:$0x1]
    %49 = vrot.lane.b32.xlu0 %v48, 64
    %v50 = vpop.permute.xlu0 %49
    %vm51 = vcmask 589312
    %52 = vst.msk [vmem:[#allocation0] sm:$0x1] %vm51, %v50
    %s53 = scalar_lea.vmem %s0, 7
    %v54 = vld [vmem:[%s53] sm:$0x1]
    %55 = vrot.lane.b32.xlu0 %v54, 56
    %v56 = vpop.permute.xlu0 %55
    %vm57 = vcmask 523712
    %58 = vst.msk [vmem:[#allocation0] sm:$0x1] %vm57, %v56
    %s59 = scalar_lea.vmem %s0, 6
    %v60 = vld [vmem:[%s59] sm:$0x1]
    %61 = vrot.lane.b32.xlu0 %v60, 48
    %v62 = vpop.permute.xlu0 %61
    %vm63 = vcmask 458112
    %64 = vst.msk [vmem:[#allocation0] sm:$0x1] %vm63, %v62
    %s65 = scalar_lea.vmem %s0, 5
    %v66 = vld [vmem:[%s65] sm:$0x1]
    %67 = vrot.lane.b32.xlu0 %v66, 40
    %v68 = vpop.permute.xlu0 %67
    %vm69 = vcmask 392512
    %70 = vst.msk [vmem:[#allocation0] sm:$0x1] %vm69, %v68
    %s71 = scalar_lea.vmem %s0, 4
    %v72 = vld [vmem:[%s71] sm:$0x1]
    %73 = vrot.lane.b32.xlu0 %v72, 32
    %v74 = vpop.permute.xlu0 %73
    %vm75 = vcmask 326912
    %76 = vst.msk [vmem:[#allocation0] sm:$0x1] %vm75, %v74
    %s77 = scalar_lea.vmem %s0, 3
    %v78 = vld [vmem:[%s77] sm:$0x1]
    %79 = vrot.lane.b32.xlu0 %v78, 24
    %v80 = vpop.permute.xlu0 %79
    %vm81 = vcmask 261312
    %82 = vst.msk [vmem:[#allocation0] sm:$0x1] %vm81, %v80
    %s83 = scalar_lea.vmem %s0, 2
    %v84 = vld [vmem:[%s83] sm:$0x1]
    %85 = vrot.lane.b32.xlu0 %v84, 16
    %v86 = vpop.permute.xlu0 %85
    %vm87 = vcmask 195712
    %88 = vst.msk [vmem:[#allocation0] sm:$0x1] %vm87, %v86
    %s89 = scalar_lea.vmem %s0, 1
    %v90 = vld [vmem:[%s89] sm:$0x1]
    %91 = vrot.lane.b32.xlu0 %v90, 8
    %v92 = vpop.permute.xlu0 %91
    %vm93 = vcmask 130112
    %94 = vst.msk [vmem:[#allocation0] sm:$0x1] %vm93, %v92
    %s96 = sshll.u32 1, 1
    %s97 = ssub.s32 %s96, 1
    %v99 = vld [vmem:[#allocation0] sm:%s97]
    %s100 = sshll.u32 1, 1
    %s101 = ssub.s32 %s100, 1
    %102 = vst [vmem:[%s1] sm:%s101] %v99

// kernel: convblock_forward.3
$region0: #{convblock_forward.3}
  #allocation0 [shape = 'u32[]', space=smem, size = 0x4, offset = 0x4, fixed_abs, tag = 'smem constant byte address 0x4 - core index']
  #allocation1 [shape = 'u32[144,128]{1,0:T(1,128)}', space=vmem, size = 0x12000, scoped, tag = 'internal scratch']
  %s0 = inlined_call_operand.vmem [shape: f32[32,64], index: 0, kind: input, shape index: {}]
  %s1 = inlined_call_operand.vmem [shape: f32[1,2,64], index: 1, kind: output, shape index: {}]
  %s2 = sld [smem:[#allocation0]]
  $region14: #{convblock_forward.3} parent=0
    _
  %s4 = ssub.s32 1, %s2
  %s5 = scalar_select 0, %s4, %s2
  // Predicated region
  $region2: #{convblock_forward.3} parent=0 // pred_check
    _
  $region3: #{convblock_forward.3} parent=0 // pred_check_branch
    %7 = sbr.rel (0) target = $region5
  $region4: #{convblock_forward.3} parent=0 // pred_region
    _
  $region5: #{convblock_forward.3} parent=0 // pred_fallthru
    _
  %v8 = vld [vmem:[%s0] sm:$0xff]
  %v9 = vld [vmem:[%s0 + $0x8] sm:$0xff]
  %v10 = vld [vmem:[%s0 + $0x10] sm:$0xff]
  %v11 = vld [vmem:[%s0 + $0x18] sm:$0xff]
  %vm12 = vcmask 523264
  %v13 = vsel %vm12, %v8, 0.0
  %v14 = vsel %vm12, %v9, 0.0
  %v15 = vadd.f32 %v13, %v14
  %v16 = vsel %vm12, %v10, 0.0
  %v17 = vadd.f32 %v15, %v16
  %v18 = vsel %vm12, %v11, 0.0
  %v19 = vadd.f32 %v17, %v18
  %v20 = vrot.slane %v19, 4
  %v21 = vadd.f32 %v19, %v20
  %v22 = vrot.slane %v21, 2
  %v23 = vadd.f32 %v21, %v22
  %v24 = vrot.slane %v23, 1
  %v25 = vadd.f32 %v23, %v24
  %v26 = vmul.f32 %v8, %v8
  %v27 = vmul.f32 %v9, %v9
  %v28 = vmul.f32 %v10, %v10
  %v29 = vmul.f32 %v11, %v11
  %v30 = vsel %vm12, %v26, 0.0
  %v31 = vsel %vm12, %v27, 0.0
  %v32 = vadd.f32 %v30, %v31
  %v33 = vsel %vm12, %v28, 0.0
  %v34 = vadd.f32 %v32, %v33
  %v35 = vsel %vm12, %v29, 0.0
  %v36 = vadd.f32 %v34, %v35
  %v37 = vrot.slane %v36, 4
  %v38 = vadd.f32 %v36, %v37
  %v39 = vrot.slane %v38, 2
  %v40 = vadd.f32 %v38, %v39
  %v41 = vrot.slane %v40, 1
  %v42 = vadd.f32 %v40, %v41
  %vm43 = vcmask 1040384
  %v44 = vsel %vm43, %v25, %v42
  %vm45 = vcmask 517120
  %46 = vst.msk [vmem:[%s1] sm:$0x3] %vm45, %v44
  // Predicated region
  $region6: #{convblock_forward.3} parent=0 // pred_check
    _
  $region7: #{convblock_forward.3} parent=0 // pred_check_branch
    %48 = sbr.rel (0) target = $region9
  $region8: #{convblock_forward.3} parent=0 // pred_region
    _
  $region9: #{convblock_forward.3} parent=0 // pred_fallthru
    _
  // Predicated region
  $region10: #{convblock_forward.3} parent=0 // pred_check
    _
  $region11: #{convblock_forward.3} parent=0 // pred_check_branch
    %50 = sbr.rel (0) target = $region13
  $region12: #{convblock_forward.3} parent=0 // pred_region
    _
  $region13: #{convblock_forward.3} parent=0 // pred_fallthru
    _

// kernel: convblock_forward.4
$region0: #{convblock_forward.4}
  #allocation0 [shape = 'u32[]', space=smem, size = 0x4, offset = 0x4, fixed_abs, tag = 'smem constant byte address 0x4 - core index']
  #allocation1 [shape = 'u32[144,128]{1,0:T(1,128)}', space=vmem, size = 0x12000, scoped, tag = 'internal scratch']
  %s0 = inlined_call_operand.vmem [shape: f32[32,64], index: 0, kind: input, shape index: {}]
  %s1 = inlined_call_operand.vmem [shape: f32[1,64], index: 1, kind: input, shape index: {}]
  %s2 = inlined_call_operand.vmem [shape: f32[1,64], index: 2, kind: input, shape index: {}]
  %s3 = inlined_call_operand.vmem [shape: bf16[3,64,128], index: 3, kind: input, shape index: {}]
  %s4 = inlined_call_operand.vmem [shape: bf16[32,128], index: 4, kind: output, shape index: {0}]
  %s5 = inlined_call_operand.vmem [shape: f32[1,2,128], index: 5, kind: output, shape index: {1}]
  %6 = xla_tuple %s4, %s5
  %s7 = sld [smem:[#allocation0]]
  $region34: #{convblock_forward.4} parent=0
    _
  %s9 = ssub.s32 1, %s7
  %s10 = scalar_select 0, %s9, %s7
  // Predicated region
  $region2: #{convblock_forward.4} parent=0 // pred_check
    _
  $region3: #{convblock_forward.4} parent=0 // pred_check_branch
    %12 = sbr.rel (0) target = $region5
  $region4: #{convblock_forward.4} parent=0 // pred_region
    _
  $region5: #{convblock_forward.4} parent=0 // pred_fallthru
    _
  // Predicated region
  $region6: #{convblock_forward.4} parent=0 // pred_check
    _
  $region7: #{convblock_forward.4} parent=0 // pred_check_branch
    %14 = sbr.rel (0) target = $region9
  $region8: #{convblock_forward.4} parent=0 // pred_region
    _
  $region9: #{convblock_forward.4} parent=0 // pred_fallthru
    _
  // Predicated region
  $region10: #{convblock_forward.4} parent=0 // pred_check
    _
  $region11: #{convblock_forward.4} parent=0 // pred_check_branch
    %16 = sbr.rel (0) target = $region13
  $region12: #{convblock_forward.4} parent=0 // pred_region
    _
  $region13: #{convblock_forward.4} parent=0 // pred_fallthru
    _
  // Predicated region
  $region14: #{convblock_forward.4} parent=0 // pred_check
    _
  $region15: #{convblock_forward.4} parent=0 // pred_check_branch
    %18 = sbr.rel (0) target = $region17
  $region16: #{convblock_forward.4} parent=0 // pred_region
    _
  $region17: #{convblock_forward.4} parent=0 // pred_fallthru
    _
  %v20 = vld [vmem:[%s0] sm:$0xff]
  %v21 = vld [vmem:[%s0 + $0x8] sm:$0xff]
  %v22 = vld [vmem:[%s0 + $0x10] sm:$0xff]
  %v23 = vld [vmem:[%s0 + $0x18] sm:$0xff]
  %v24 = vld [vmem:[%s1] sm:$0x1]
  %v26 = vlaneseq
  %v27 = vshrl.u32 %v26, 7
  %v28 = vsub.s32 0, %v27
  %v29 = vrot.slane %v24, %v28
  %v31 = vmul.f32 %v20, %v29
  %v32 = vmul.f32 %v21, %v29
  %v33 = vmul.f32 %v22, %v29
  %v34 = vmul.f32 %v23, %v29
  %v35 = vld [vmem:[%s2] sm:$0x1]
  %v37 = vlaneseq
  %v38 = vshrl.u32 %v37, 7
  %v39 = vsub.s32 0, %v38
  %v40 = vrot.slane %v35, %v39
  %v42 = vadd.f32 %v31, %v40
  %v43 = vadd.f32 %v32, %v40
  %v44 = vadd.f32 %v33, %v40
  %v45 = vadd.f32 %v34, %v40
  %v46 = vlaneseq
  %v47 = vshrl.u32 %v46, 7
  %v48 = vadd.s32 %v47, 8
  %v49 = vadd.s32 %v47, 16
  %v50 = vadd.s32 %v47, 24
  %vm51 = vcmp.lt.s32.totalorder %v47, 0
  %v52 = vsub.s32 0, %v47
  %v53 = vsel %vm51, %v52, %v47
  %v54 = vshrl.u32 %v53, 4
  %v55 = vand.u32 %v53, 15
  %v56 = vsub.s32 0, %v55
  %v57 = vsel %vm51, %v56, %v55
  %vm58 = vcmp.lt.s32.totalorder %v48, 0
  %v59 = vsub.s32 0, %v48
  %v60 = vsel %vm58, %v59, %v48
  %v61 = vshrl.u32 %v60, 4
  %v62 = vand.u32 %v60, 15
  %v63 = vsub.s32 0, %v62
  %v64 = vsel %vm58, %v63, %v62
  %vm65 = vcmp.lt.s32.totalorder %v49, 0
  %v66 = vsub.s32 0, %v49
  %v67 = vsel %vm65, %v66, %v49
  %v68 = vshrl.u32 %v67, 4
  %v69 = vand.u32 %v67, 15
  %v70 = vsub.s32 0, %v69
  %v71 = vsel %vm65, %v70, %v69
  %vm72 = vcmp.lt.s32.totalorder %v50, 0
  %v73 = vsub.s32 0, %v50
  %v74 = vsel %vm72, %v73, %v50
  %v75 = vshrl.u32 %v74, 4
  %v76 = vand.u32 %v74, 15
  %v77 = vsub.s32 0, %v76
  %v78 = vsel %vm72, %v77, %v76
  %vm79 = vcmp.ne.s32.totalorder %v57, 0
  %vm80 = vcmp.ne.s32.totalorder %v64, 0
  %vm81 = vcmp.ne.s32.totalorder %v71, 0
  %vm82 = vcmp.ne.s32.totalorder %v78, 0
  %vm83 = vcmp.lt.s32.totalorder %v57, 0
  %vm84 = vcmp.lt.s32.totalorder %v64, 0
  %vm85 = vcmp.lt.s32.totalorder %v71, 0
  %vm86 = vcmp.lt.s32.totalorder %v78, 0
  %vm87 = vmand %vm83, %vm79
  %vm88 = vmand %vm84, %vm80
  %vm89 = vmand %vm85, %vm81
  %vm90 = vmand %vm86, %vm82
  %v91 = vadd.s32 %v57, 16
  %v92 = vadd.s32 %v64, 16
  %v93 = vadd.s32 %v71, 16
  %v94 = vadd.s32 %v78, 16
  %v95 = vsel %vm87, %v91, %v57
  %v96 = vsel %vm88, %v92, %v64
  %v97 = vsel %vm89, %v93, %v71
  %v98 = vsel %vm90, %v94, %v78
  %vm99 = vcmp.ne.s32.totalorder %v95, 0
  %vm100 = vcmp.ne.s32.totalorder %v96, 0
  %vm101 = vcmp.ne.s32.totalorder %v97, 0
  %vm102 = vcmp.ne.s32.totalorder %v98, 0
  %v103 = vrot.slane %v42, 7
  %v104 = vrot.slane %v43, 7
  %v105 = vrot.slane %v44, 7
  %v106 = vrot.slane %v45, 7
  %vm107 = vcmp.lt.s32.totalorder %v47, 1
  %v108 = vsel %vm107, %v105, %v106
  %v109 = vsel %vm107, %v104, %v105
  %v110 = vsel %vm107, %v103, %v104
  %v111 = vsel %vm107, %v106, %v103
  %v112 = vsel %vm99, %v111, 0.0
  %v113 = vsel %vm100, %v110, 0.0
  %v114 = vsel %vm101, %v109, 0.0
  %v115 = vsel %vm102, %v108, 0.0
  %vm116 = vcmp.ne.s32.totalorder %v95, 15
  %vm117 = vcmp.ne.s32.totalorder %v96, 15
  %vm118 = vcmp.ne.s32.totalorder %v97, 15
  %vm119 = vcmp.ne.s32.totalorder %v98, 15
  %v120 = vrot.slane %v42, 1
  %v121 = vrot.slane %v43, 1
  %v122 = vrot.slane %v44, 1
  %v123 = vrot.slane %v45, 1
  %vm124 = vcmp.lt.s32.totalorder %v47, 7
  %v125 = vsel %vm124, %v122, %v123
  %v126 = vsel %vm124, %v121, %v122
  %v127 = vsel %vm124, %v120, %v121
  %v128 = vsel %vm124, %v123, %v120
  %v129 = vsel %vm116, %v127, 0.0
  %v130 = vsel %vm117, %v126, 0.0
  %v131 = vsel %vm118, %v125, 0.0
  %v132 = vsel %vm119, %v128, 0.0
  %v133 = vpack.c.bf16 %v113, %v112
  %v134 = vpack.c.bf16 %v115, %v114
  %v135 = vld [vmem:[%s3] sm:$0xf]
  %v136 = vld [vmem:[%s3 + $0x4] sm:$0xf]
  %v137 = vld [vmem:[%s3 + $0x8] sm:$0xf]
  %v138 = vld [vmem:[%s3 + $0xc] sm:$0xf]
  %v139 = vld [vmem:[%s3 + $0x10] sm:$0xf]
  %v140 = vld [vmem:[%s3 + $0x14] sm:$0xf]
  %v141 = vld [vmem:[%s3 + $0x18] sm:$0xf]
  %v142 = vld [vmem:[%s3 + $0x1c] sm:$0xf]
  %v143 = vpack.c.bf16 %v43, %v42
  %v144 = vpack.c.bf16 %v45, %v44
  %s145 = scalar_lea.vmem %s3, 32
  %v146 = vld [vmem:[%s145] sm:$0xf]
  %v147 = vld [vmem:[%s145 + $0x4] sm:$0xf]
  %v148 = vld [vmem:[%s145 + $0x8] sm:$0xf]
  %v149 = vld [vmem:[%s145 + $0xc] sm:$0xf]
  %v150 = vld [vmem:[%s145 + $0x10] sm:$0xf]
  %v151 = vld [vmem:[%s145 + $0x14] sm:$0xf]
  %v152 = vld [vmem:[%s145 + $0x18] sm:$0xf]
  %v153 = vld [vmem:[%s145 + $0x1c] sm:$0xf]
  %v162 = vunpack.c.l.b16 %v146
  %v163 = vunpack.c.l.b16 %v147
  %v164 = vunpack.c.l.b16 %v148
  %v165 = vunpack.c.l.b16 %v149
  %v166 = vunpack.c.l.b16 %v150
  %v167 = vunpack.c.l.b16 %v151
  %v168 = vunpack.c.l.b16 %v152
  %v169 = vunpack.c.l.b16 %v153
  %v170 = vpack.c.b16 %v163, %v162
  %v171 = vpack.c.b16 %v165, %v164
  %v172 = vpack.c.b16 %v167, %v166
  %v173 = vpack.c.b16 %v169, %v168
  %vm178 = vcmask 523264
  %v180 = vsel %vm178, %v143, 0
  %v183 = vsel %vm178, %v144, 0
  %185 = vmatprep.subr.bf16.mxu0 0
  %186 = vmatpush1.bf16.msra.mxu0 0
  %187 = vmatprep.subr.bf16.mxu0 0
  %188 = vmatpush1.bf16.msra.mxu0 0
  %189 = vmatprep.subr.bf16.mxu0 0
  %190 = vmatpush1.bf16.msra.mxu0 0
  %191 = vmatprep.subr.bf16.mxu0 0
  %192 = vmatpush1.bf16.msra.mxu0 0
  %193 = vmatprep.subr.bf16.mxu0 0
  %194 = vmatpush1.bf16.msra.mxu0 %v173
  %195 = vmatprep.subr.bf16.mxu0 0
  %196 = vmatpush1.bf16.msra.mxu0 %v172
  %197 = vmatprep.subr.bf16.mxu0 0
  %198 = vmatpush1.bf16.msra.mxu0 %v171
  %199 = vmatprep.subr.bf16.mxu0 0
  %200 = vmatpush1.bf16.msra.mxu0 %v170
  %201 = vmatprep.subr.bf16.mxu0 0
  %202 = vmatpush2.bf16.msra.mxu0 0
  %203 = vmatprep.subr.bf16.mxu0 0
  %204 = vmatpush2.bf16.msra.mxu0 0
  %205 = vmatprep.subr.bf16.mxu0 0
  %206 = vmatpush2.bf16.msra.mxu0 0
  %207 = vmatprep.subr.bf16.mxu0 0
  %208 = vmatpush2.bf16.msra.mxu0 0
  %209 = vmatprep.subr.bf16.mxu0 0
  %210 = vmatpush2.bf16.msra.mxu0 0
  %211 = vmatprep.subr.bf16.mxu0 0
  %212 = vmatpush2.bf16.msra.mxu0 0
  %213 = vmatprep.subr.bf16.mxu0 0
  %214 = vmatpush2.bf16.msra.mxu0 0
  %215 = vmatprep.subr.bf16.mxu0 0
  %216 = vmatpush2.bf16.msra.mxu0 0
  %217 = vmatprep.mubr.bf16.mxu0 0
  %218 = vmatmul.mubr.bf16.gmra.mxu0 %v180
  %v219 = vpop.f32.mrf.mxu0
  %v220 = vadd.f32 0.0, %v219
  %v221 = vpop.f32.mrf.mxu0
  %v222 = vpop.f32.mrf.mxu0
  %v223 = vadd.f32 0.0, %v222
  %v224 = vpop.f32.mrf.mxu0
  %225 = vmatprep.mubr.bf16.mxu0 0
  %226 = vmatmul.mubr.bf16.gmra.mxu0 %v183
  %v227 = vpop.f32.mrf.mxu0
  %v228 = vadd.f32 0.0, %v227
  %v229 = vpop.f32.mrf.mxu0
  %v230 = vpop.f32.mrf.mxu0
  %v231 = vadd.f32 0.0, %v230
  %v232 = vpop.f32.mrf.mxu0
  %233 = vdwg.mxu0
  %v242 = vunpack.c.l.b16 %v135
  %v243 = vunpack.c.l.b16 %v136
  %v244 = vunpack.c.l.b16 %v137
  %v245 = vunpack.c.l.b16 %v138
  %v246 = vunpack.c.l.b16 %v139
  %v247 = vunpack.c.l.b16 %v140
  %v248 = vunpack.c.l.b16 %v141
  %v249 = vunpack.c.l.b16 %v142
  %v250 = vpack.c.b16 %v243, %v242
  %v251 = vpack.c.b16 %v245, %v244
  %v252 = vpack.c.b16 %v247, %v246
  %v253 = vpack.c.b16 %v249, %v248
  %v259 = vsel %vm178, %v133, 0
  %v262 = vsel %vm178, %v134, 0
  %264 = vmatprep.subr.bf16.mxu0 0
  %265 = vmatpush1.bf16.msra.mxu0 0
  %266 = vmatprep.subr.bf16.mxu0 0
  %267 = vmatpush1.bf16.msra.mxu0 0
  %268 = vmatprep.subr.bf16.mxu0 0
  %269 = vmatpush1.bf16.msra.mxu0 0
  %270 = vmatprep.subr.bf16.mxu0 0
  %271 = vmatpush1.bf16.msra.mxu0 0
  %272 = vmatprep.subr.bf16.mxu0 0
  %273 = vmatpush1.bf16.msra.mxu0 %v253
  %274 = vmatprep.subr.bf16.mxu0 0
  %275 = vmatpush1.bf16.msra.mxu0 %v252
  %276 = vmatprep.subr.bf16.mxu0 0
  %277 = vmatpush1.bf16.msra.mxu0 %v251
  %278 = vmatprep.subr.bf16.mxu0 0
  %279 = vmatpush1.bf16.msra.mxu0 %v250
  %280 = vmatprep.subr.bf16.mxu0 0
  %281 = vmatpush2.bf16.msra.mxu0 0
  %282 = vmatprep.subr.bf16.mxu0 0
  %283 = vmatpush2.bf16.msra.mxu0 0
  %284 = vmatprep.subr.bf16.mxu0 0
  %285 = vmatpush2.bf16.msra.mxu0 0
  %286 = vmatprep.subr.bf16.mxu0 0
  %287 = vmatpush2.bf16.msra.mxu0 0
  %288 = vmatprep.subr.bf16.mxu0 0
  %289 = vmatpush2.bf16.msra.mxu0 0
  %290 = vmatprep.subr.bf16.mxu0 0
  %291 = vmatpush2.bf16.msra.mxu0 0
  %292 = vmatprep.subr.bf16.mxu0 0
  %293 = vmatpush2.bf16.msra.mxu0 0
  %294 = vmatprep.subr.bf16.mxu0 0
  %295 = vmatpush2.bf16.msra.mxu0 0
  %296 = vmatprep.mubr.bf16.mxu0 0
  %297 = vmatmul.mubr.bf16.gmra.mxu0 %v259
  %v298 = vpop.f32.mrf.mxu0
  %v299 = vadd.f32 %v220, %v298
  %v300 = vpop.f32.mrf.mxu0
  %v301 = vpop.f32.mrf.mxu0
  %v302 = vadd.f32 %v223, %v301
  %v303 = vpop.f32.mrf.mxu0
  %304 = vmatprep.mubr.bf16.mxu0 0
  %305 = vmatmul.mubr.bf16.gmra.mxu0 %v262
  %v306 = vpop.f32.mrf.mxu0
  %v307 = vadd.f32 %v228, %v306
  %v308 = vpop.f32.mrf.mxu0
  %v309 = vpop.f32.mrf.mxu0
  %v310 = vadd.f32 %v231, %v309
  %v311 = vpop.f32.mrf.mxu0
  %312 = vdwg.mxu0
  %v313 = vpack.c.bf16 %v130, %v129
  %v314 = vpack.c.bf16 %v132, %v131
  %s315 = scalar_lea.vmem %s3, 64
  %v316 = vld [vmem:[%s315] sm:$0xf]
  %v317 = vld [vmem:[%s315 + $0x4] sm:$0xf]
  %v318 = vld [vmem:[%s315 + $0x8] sm:$0xf]
  %v319 = vld [vmem:[%s315 + $0xc] sm:$0xf]
  %v320 = vld [vmem:[%s315 + $0x10] sm:$0xf]
  %v321 = vld [vmem:[%s315 + $0x14] sm:$0xf]
  %v322 = vld [vmem:[%s315 + $0x18] sm:$0xf]
  %v323 = vld [vmem:[%s315 + $0x1c] sm:$0xf]
  %v332 = vunpack.c.l.b16 %v316
  %v333 = vunpack.c.l.b16 %v317
  %v334 = vunpack.c.l.b16 %v318
  %v335 = vunpack.c.l.b16 %v319
  %v336 = vunpack.c.l.b16 %v320
  %v337 = vunpack.c.l.b16 %v321
  %v338 = vunpack.c.l.b16 %v322
  %v339 = vunpack.c.l.b16 %v323
  %v340 = vpack.c.b16 %v333, %v332
  %v341 = vpack.c.b16 %v335, %v334
  %v342 = vpack.c.b16 %v337, %v336
  %v343 = vpack.c.b16 %v339, %v338
  %v349 = vsel %vm178, %v313, 0
  %v352 = vsel %vm178, %v314, 0
  %354 = vmatprep.subr.bf16.mxu0 0
  %355 = vmatpush1.bf16.msra.mxu0 0
  %356 = vmatprep.subr.bf16.mxu0 0
  %357 = vmatpush1.bf16.msra.mxu0 0
  %358 = vmatprep.subr.bf16.mxu0 0
  %359 = vmatpush1.bf16.msra.mxu0 0
  %360 = vmatprep.subr.bf16.mxu0 0
  %361 = vmatpush1.bf16.msra.mxu0 0
  %362 = vmatprep.subr.bf16.mxu0 0
  %363 = vmatpush1.bf16.msra.mxu0 %v343
  %364 = vmatprep.subr.bf16.mxu0 0
  %365 = vmatpush1.bf16.msra.mxu0 %v342
  %366 = vmatprep.subr.bf16.mxu0 0
  %367 = vmatpush1.bf16.msra.mxu0 %v341
  %368 = vmatprep.subr.bf16.mxu0 0
  %369 = vmatpush1.bf16.msra.mxu0 %v340
  %370 = vmatprep.subr.bf16.mxu0 0
  %371 = vmatpush2.bf16.msra.mxu0 0
  %372 = vmatprep.subr.bf16.mxu0 0
  %373 = vmatpush2.bf16.msra.mxu0 0
  %374 = vmatprep.subr.bf16.mxu0 0
  %375 = vmatpush2.bf16.msra.mxu0 0
  %376 = vmatprep.subr.bf16.mxu0 0
  %377 = vmatpush2.bf16.msra.mxu0 0
  %378 = vmatprep.subr.bf16.mxu0 0
  %379 = vmatpush2.bf16.msra.mxu0 0
  %380 = vmatprep.subr.bf16.mxu0 0
  %381 = vmatpush2.bf16.msra.mxu0 0
  %382 = vmatprep.subr.bf16.mxu0 0
  %383 = vmatpush2.bf16.msra.mxu0 0
  %384 = vmatprep.subr.bf16.mxu0 0
  %385 = vmatpush2.bf16.msra.mxu0 0
  %386 = vmatprep.mubr.bf16.mxu0 0
  %387 = vmatmul.mubr.bf16.gmra.mxu0 %v349
  %v388 = vpop.f32.mrf.mxu0
  %v389 = vadd.f32 0.0, %v388
  %v390 = vpop.f32.mrf.mxu0
  %v391 = vpop.f32.mrf.mxu0
  %v392 = vadd.f32 0.0, %v391
  %v393 = vpop.f32.mrf.mxu0
  %394 = vmatprep.mubr.bf16.mxu0 0
  %395 = vmatmul.mubr.bf16.gmra.mxu0 %v352
  %v396 = vpop.f32.mrf.mxu0
  %v397 = vadd.f32 0.0, %v396
  %v398 = vpop.f32.mrf.mxu0
  %v399 = vpop.f32.mrf.mxu0
  %v400 = vadd.f32 0.0, %v399
  %v401 = vpop.f32.mrf.mxu0
  %402 = vdwg.mxu0
  %v403 = vadd.f32 %v299, %v389
  %v404 = vadd.f32 %v302, %v392
  %v405 = vadd.f32 %v307, %v397
  %v406 = vadd.f32 %v310, %v400
  %v407 = vmax.f32 %v403, 0.0
  %v408 = vmax.f32 %v404, 0.0
  %v409 = vmax.f32 %v405, 0.0
  %v410 = vmax.f32 %v406, 0.0
  %v411 = vpack.c.bf16 %v408, %v407
  %v412 = vpack.c.bf16 %v410, %v409
  %v415 = vunpack.c.l.b16 %v411
  %v416 = vunpack.c.h.b16 %v411
  %v417 = vunpack.c.l.b16 %v412
  %v418 = vunpack.c.h.b16 %v412
  %v419 = vpack.c.b16 %v415, %v415
  %v420 = vpack.c.b16 %v416, %v416
  %v421 = vpack.c.b16 %v417, %v417
  %v422 = vpack.c.b16 %v418, %v418
  %427 = vst [vmem:[%s4] sm:$0xf] %v419
  %428 = vst [vmem:[%s4 + $0x4] sm:$0xf] %v420
  %429 = vst [vmem:[%s4 + $0x8] sm:$0xf] %v421
  %430 = vst [vmem:[%s4 + $0xc] sm:$0xf] %v422
  %v431 = vadd.f32 %v407, %v408
  %v432 = vadd.f32 %v431, %v409
  %v433 = vadd.f32 %v432, %v410
  %v434 = vrot.slane %v433, 4
  %v435 = vadd.f32 %v433, %v434
  %v436 = vrot.slane %v435, 2
  %v437 = vadd.f32 %v435, %v436
  %v438 = vrot.slane %v437, 1
  %v439 = vadd.f32 %v437, %v438
  %v440 = vmul.f32 %v407, %v407
  %v441 = vmul.f32 %v408, %v408
  %v442 = vmul.f32 %v409, %v409
  %v443 = vmul.f32 %v410, %v410
  %v444 = vadd.f32 %v440, %v441
  %v445 = vadd.f32 %v444, %v442
  %v446 = vadd.f32 %v445, %v443
  %v447 = vrot.slane %v446, 4
  %v448 = vadd.f32 %v446, %v447
  %v449 = vrot.slane %v448, 2
  %v450 = vadd.f32 %v448, %v449
  %v451 = vrot.slane %v450, 1
  %v452 = vadd.f32 %v450, %v451
  %vm453 = vcmask 1040384
  %v454 = vsel %vm453, %v439, %v452
  %455 = vst [vmem:[%s5] sm:$0x3] %v454
  // Predicated region
  $region18: #{convblock_forward.4} parent=0 // pred_check
    _
  $region19: #{convblock_forward.4} parent=0 // pred_check_branch
    %457 = sbr.rel (0) target = $region21
  $region20: #{convblock_forward.4} parent=0 // pred_region
    _
  $region21: #{convblock_forward.4} parent=0 // pred_fallthru
    _
  // Predicated region
  $region22: #{convblock_forward.4} parent=0 // pred_check
    _
  $region23: #{convblock_forward.4} parent=0 // pred_check_branch
    %459 = sbr.rel (0) target = $region25
  $region24: #{convblock_forward.4} parent=0 // pred_region
    _
  $region25: #{convblock_forward.4} parent=0 // pred_fallthru
    _
  // Predicated region
  $region26: #{convblock_forward.4} parent=0 // pred_check
    _
  $region27: #{convblock_forward.4} parent=0 // pred_check_branch
    %461 = sbr.rel (0) target = $region29
  $region28: #{convblock_forward.4} parent=0 // pred_region
    _
  $region29: #{convblock_forward.4} parent=0 // pred_fallthru
    _
  // Predicated region
  $region30: #{convblock_forward.4} parent=0 // pred_check
    _
  $region31: #{convblock_forward.4} parent=0 // pred_check_branch
    %463 = sbr.rel (0) target = $region33
  $region32: #{convblock_forward.4} parent=0 // pred_region
    _
  $region33: #{convblock_forward.4} parent=0 // pred_fallthru
    _

// kernel: convblock_forward.5
$region0: #{convblock_forward.5}
  #allocation0 [shape = 'u32[]', space=smem, size = 0x4, offset = 0x4, fixed_abs, tag = 'smem constant byte address 0x4 - core index']
  #allocation1 [shape = 'u32[144,128]{1,0:T(1,128)}', space=vmem, size = 0x12000, scoped, tag = 'internal scratch']
  %s0 = inlined_call_operand.vmem [shape: bf16[32,128], index: 0, kind: input, shape index: {}]
  %s1 = inlined_call_operand.vmem [shape: f32[1,128], index: 1, kind: input, shape index: {}]
  %s2 = inlined_call_operand.vmem [shape: f32[1,128], index: 2, kind: input, shape index: {}]
  %s3 = inlined_call_operand.vmem [shape: bf16[3,128,128], index: 3, kind: input, shape index: {}]
  %s4 = inlined_call_operand.vmem [shape: f32[32,128], index: 4, kind: output, shape index: {}]
  %s5 = sld [smem:[#allocation0]]
  $region26: #{convblock_forward.5} parent=0
    _
  %s7 = ssub.s32 1, %s5
  %s8 = scalar_select 0, %s7, %s5
  // Predicated region
  $region2: #{convblock_forward.5} parent=0 // pred_check
    _
  $region3: #{convblock_forward.5} parent=0 // pred_check_branch
    %10 = sbr.rel (0) target = $region5
  $region4: #{convblock_forward.5} parent=0 // pred_region
    _
  $region5: #{convblock_forward.5} parent=0 // pred_fallthru
    _
  // Predicated region
  $region6: #{convblock_forward.5} parent=0 // pred_check
    _
  $region7: #{convblock_forward.5} parent=0 // pred_check_branch
    %12 = sbr.rel (0) target = $region9
  $region8: #{convblock_forward.5} parent=0 // pred_region
    _
  $region9: #{convblock_forward.5} parent=0 // pred_fallthru
    _
  // Predicated region
  $region10: #{convblock_forward.5} parent=0 // pred_check
    _
  $region11: #{convblock_forward.5} parent=0 // pred_check_branch
    %14 = sbr.rel (0) target = $region13
  $region12: #{convblock_forward.5} parent=0 // pred_region
    _
  $region13: #{convblock_forward.5} parent=0 // pred_fallthru
    _
  // Predicated region
  $region14: #{convblock_forward.5} parent=0 // pred_check
    _
  $region15: #{convblock_forward.5} parent=0 // pred_check_branch
    %16 = sbr.rel (0) target = $region17
  $region16: #{convblock_forward.5} parent=0 // pred_region
    _
  $region17: #{convblock_forward.5} parent=0 // pred_fallthru
    _
  %v18 = vld [vmem:[%s0] sm:$0xf]
  %v19 = vld [vmem:[%s0 + $0x4] sm:$0xf]
  %v20 = vld [vmem:[%s0 + $0x8] sm:$0xf]
  %v21 = vld [vmem:[%s0 + $0xc] sm:$0xf]
  %v22 = vunpack.c.l.bf16 %v18
  %v23 = vunpack.c.l.bf16 %v19
  %v24 = vunpack.c.l.bf16 %v20
  %v25 = vunpack.c.l.bf16 %v21
  %v26 = vld [vmem:[%s1] sm:$0x1]
  %v28 = vlaneseq
  %v29 = vshrl.u32 %v28, 7
  %v30 = vsub.s32 0, %v29
  %v31 = vrot.slane %v26, %v30
  %v33 = vmul.f32 %v22, %v31
  %v34 = vmul.f32 %v23, %v31
  %v35 = vmul.f32 %v24, %v31
  %v36 = vmul.f32 %v25, %v31
  %v37 = vld [vmem:[%s2] sm:$0x1]
  %v39 = vlaneseq
  %v40 = vshrl.u32 %v39, 7
  %v41 = vsub.s32 0, %v40
  %v42 = vrot.slane %v37, %v41
  %v44 = vadd.f32 %v33, %v42
  %v45 = vadd.f32 %v34, %v42
  %v46 = vadd.f32 %v35, %v42
  %v47 = vadd.f32 %v36, %v42
  %v48 = vlaneseq
  %v49 = vshrl.u32 %v48, 7
  %v50 = vadd.s32 %v49, 8
  %v51 = vadd.s32 %v49, 16
  %v52 = vadd.s32 %v49, 24
  %vm53 = vcmp.lt.s32.totalorder %v49, 0
  %v54 = vsub.s32 0, %v49
  %v55 = vsel %vm53, %v54, %v49
  %v56 = vshrl.u32 %v55, 4
  %v57 = vand.u32 %v55, 15
  %v58 = vsub.s32 0, %v57
  %v59 = vsel %vm53, %v58, %v57
  %vm60 = vcmp.lt.s32.totalorder %v50, 0
  %v61 = vsub.s32 0, %v50
  %v62 = vsel %vm60, %v61, %v50
  %v63 = vshrl.u32 %v62, 4
  %v64 = vand.u32 %v62, 15
  %v65 = vsub.s32 0, %v64
  %v66 = vsel %vm60, %v65, %v64
  %vm67 = vcmp.lt.s32.totalorder %v51, 0
  %v68 = vsub.s32 0, %v51
  %v69 = vsel %vm67, %v68, %v51
  %v70 = vshrl.u32 %v69, 4
  %v71 = vand.u32 %v69, 15
  %v72 = vsub.s32 0, %v71
  %v73 = vsel %vm67, %v72, %v71
  %vm74 = vcmp.lt.s32.totalorder %v52, 0
  %v75 = vsub.s32 0, %v52
  %v76 = vsel %vm74, %v75, %v52
  %v77 = vshrl.u32 %v76, 4
  %v78 = vand.u32 %v76, 15
  %v79 = vsub.s32 0, %v78
  %v80 = vsel %vm74, %v79, %v78
  %vm81 = vcmp.ne.s32.totalorder %v59, 0
  %vm82 = vcmp.ne.s32.totalorder %v66, 0
  %vm83 = vcmp.ne.s32.totalorder %v73, 0
  %vm84 = vcmp.ne.s32.totalorder %v80, 0
  %vm85 = vcmp.lt.s32.totalorder %v59, 0
  %vm86 = vcmp.lt.s32.totalorder %v66, 0
  %vm87 = vcmp.lt.s32.totalorder %v73, 0
  %vm88 = vcmp.lt.s32.totalorder %v80, 0
  %vm89 = vmand %vm85, %vm81
  %vm90 = vmand %vm86, %vm82
  %vm91 = vmand %vm87, %vm83
  %vm92 = vmand %vm88, %vm84
  %v93 = vadd.s32 %v59, 16
  %v94 = vadd.s32 %v66, 16
  %v95 = vadd.s32 %v73, 16
  %v96 = vadd.s32 %v80, 16
  %v97 = vsel %vm89, %v93, %v59
  %v98 = vsel %vm90, %v94, %v66
  %v99 = vsel %vm91, %v95, %v73
  %v100 = vsel %vm92, %v96, %v80
  %vm101 = vcmp.ne.s32.totalorder %v97, 0
  %vm102 = vcmp.ne.s32.totalorder %v98, 0
  %vm103 = vcmp.ne.s32.totalorder %v99, 0
  %vm104 = vcmp.ne.s32.totalorder %v100, 0
  %v105 = vrot.slane %v44, 7
  %v106 = vrot.slane %v45, 7
  %v107 = vrot.slane %v46, 7
  %v108 = vrot.slane %v47, 7
  %vm109 = vcmp.lt.s32.totalorder %v49, 1
  %v110 = vsel %vm109, %v107, %v108
  %v111 = vsel %vm109, %v106, %v107
  %v112 = vsel %vm109, %v105, %v106
  %v113 = vsel %vm109, %v108, %v105
  %v114 = vsel %vm101, %v113, 0.0
  %v115 = vsel %vm102, %v112, 0.0
  %v116 = vsel %vm103, %v111, 0.0
  %v117 = vsel %vm104, %v110, 0.0
  %vm118 = vcmp.ne.s32.totalorder %v97, 15
  %vm119 = vcmp.ne.s32.totalorder %v98, 15
  %vm120 = vcmp.ne.s32.totalorder %v99, 15
  %vm121 = vcmp.ne.s32.totalorder %v100, 15
  %v122 = vrot.slane %v44, 1
  %v123 = vrot.slane %v45, 1
  %v124 = vrot.slane %v46, 1
  %v125 = vrot.slane %v47, 1
  %vm126 = vcmp.lt.s32.totalorder %v49, 7
  %v127 = vsel %vm126, %v124, %v125
  %v128 = vsel %vm126, %v123, %v124
  %v129 = vsel %vm126, %v122, %v123
  %v130 = vsel %vm126, %v125, %v122
  %v131 = vsel %vm118, %v129, 0.0
  %v132 = vsel %vm119, %v128, 0.0
  %v133 = vsel %vm120, %v127, 0.0
  %v134 = vsel %vm121, %v130, 0.0
  %v135 = vpack.c.bf16 %v115, %v114
  %v136 = vpack.c.bf16 %v117, %v116
  %v137 = vld [vmem:[%s3] sm:$0xf]
  %v138 = vld [vmem:[%s3 + $0x4] sm:$0xf]
  %v139 = vld [vmem:[%s3 + $0x8] sm:$0xf]
  %v140 = vld [vmem:[%s3 + $0xc] sm:$0xf]
  %v141 = vld [vmem:[%s3 + $0x10] sm:$0xf]
  %v142 = vld [vmem:[%s3 + $0x14] sm:$0xf]
  %v143 = vld [vmem:[%s3 + $0x18] sm:$0xf]
  %v144 = vld [vmem:[%s3 + $0x1c] sm:$0xf]
  %v145 = vld [vmem:[%s3 + $0x20] sm:$0xf]
  %v146 = vld [vmem:[%s3 + $0x24] sm:$0xf]
  %v147 = vld [vmem:[%s3 + $0x28] sm:$0xf]
  %v148 = vld [vmem:[%s3 + $0x2c] sm:$0xf]
  %v149 = vld [vmem:[%s3 + $0x30] sm:$0xf]
  %v150 = vld [vmem:[%s3 + $0x34] sm:$0xf]
  %v151 = vld [vmem:[%s3 + $0x38] sm:$0xf]
  %v152 = vld [vmem:[%s3 + $0x3c] sm:$0xf]
  %v153 = vpack.c.bf16 %v45, %v44
  %v154 = vpack.c.bf16 %v47, %v46
  %s155 = scalar_lea.vmem %s3, 64
  %v156 = vld [vmem:[%s155] sm:$0xf]
  %v157 = vld [vmem:[%s155 + $0x4] sm:$0xf]
  %v158 = vld [vmem:[%s155 + $0x8] sm:$0xf]
  %v159 = vld [vmem:[%s155 + $0xc] sm:$0xf]
  %v160 = vld [vmem:[%s155 + $0x10] sm:$0xf]
  %v161 = vld [vmem:[%s155 + $0x14] sm:$0xf]
  %v162 = vld [vmem:[%s155 + $0x18] sm:$0xf]
  %v163 = vld [vmem:[%s155 + $0x1c] sm:$0xf]
  %v164 = vld [vmem:[%s155 + $0x20] sm:$0xf]
  %v165 = vld [vmem:[%s155 + $0x24] sm:$0xf]
  %v166 = vld [vmem:[%s155 + $0x28] sm:$0xf]
  %v167 = vld [vmem:[%s155 + $0x2c] sm:$0xf]
  %v168 = vld [vmem:[%s155 + $0x30] sm:$0xf]
  %v169 = vld [vmem:[%s155 + $0x34] sm:$0xf]
  %v170 = vld [vmem:[%s155 + $0x38] sm:$0xf]
  %v171 = vld [vmem:[%s155 + $0x3c] sm:$0xf]
  %v188 = vunpack.c.l.b16 %v156
  %v189 = vunpack.c.l.b16 %v157
  %v190 = vunpack.c.l.b16 %v158
  %v191 = vunpack.c.l.b16 %v159
  %v192 = vunpack.c.l.b16 %v160
  %v193 = vunpack.c.l.b16 %v161
  %v194 = vunpack.c.l.b16 %v162
  %v195 = vunpack.c.l.b16 %v163
  %v196 = vunpack.c.l.b16 %v164
  %v197 = vunpack.c.l.b16 %v165
  %v198 = vunpack.c.l.b16 %v166
  %v199 = vunpack.c.l.b16 %v167
  %v200 = vunpack.c.l.b16 %v168
  %v201 = vunpack.c.l.b16 %v169
  %v202 = vunpack.c.l.b16 %v170
  %v203 = vunpack.c.l.b16 %v171
  %v204 = vpack.c.b16 %v189, %v188
  %v205 = vpack.c.b16 %v191, %v190
  %v206 = vpack.c.b16 %v193, %v192
  %v207 = vpack.c.b16 %v195, %v194
  %v208 = vpack.c.b16 %v197, %v196
  %v209 = vpack.c.b16 %v199, %v198
  %v210 = vpack.c.b16 %v201, %v200
  %v211 = vpack.c.b16 %v203, %v202
  %220 = vmatprep.subr.bf16.mxu0 0
  %221 = vmatpush1.bf16.msra.mxu0 %v211
  %222 = vmatprep.subr.bf16.mxu0 0
  %223 = vmatpush1.bf16.msra.mxu0 %v210
  %224 = vmatprep.subr.bf16.mxu0 0
  %225 = vmatpush1.bf16.msra.mxu0 %v209
  %226 = vmatprep.subr.bf16.mxu0 0
  %227 = vmatpush1.bf16.msra.mxu0 %v208
  %228 = vmatprep.subr.bf16.mxu0 0
  %229 = vmatpush1.bf16.msra.mxu0 %v207
  %230 = vmatprep.subr.bf16.mxu0 0
  %231 = vmatpush1.bf16.msra.mxu0 %v206
  %232 = vmatprep.subr.bf16.mxu0 0
  %233 = vmatpush1.bf16.msra.mxu0 %v205
  %234 = vmatprep.subr.bf16.mxu0 0
  %235 = vmatpush1.bf16.msra.mxu0 %v204
  %236 = vmatprep.subr.bf16.mxu0 0
  %237 = vmatpush2.bf16.msra.mxu0 0
  %238 = vmatprep.subr.bf16.mxu0 0
  %239 = vmatpush2.bf16.msra.mxu0 0
  %240 = vmatprep.subr.bf16.mxu0 0
  %241 = vmatpush2.bf16.msra.mxu0 0
  %242 = vmatprep.subr.bf16.mxu0 0
  %243 = vmatpush2.bf16.msra.mxu0 0
  %244 = vmatprep.subr.bf16.mxu0 0
  %245 = vmatpush2.bf16.msra.mxu0 0
  %246 = vmatprep.subr.bf16.mxu0 0
  %247 = vmatpush2.bf16.msra.mxu0 0
  %248 = vmatprep.subr.bf16.mxu0 0
  %249 = vmatpush2.bf16.msra.mxu0 0
  %250 = vmatprep.subr.bf16.mxu0 0
  %251 = vmatpush2.bf16.msra.mxu0 0
  %252 = vmatprep.mubr.bf16.mxu0 0
  %253 = vmatmul.mubr.bf16.gmra.mxu0 %v153
  %v254 = vpop.f32.mrf.mxu0
  %v255 = vadd.f32 0.0, %v254
  %v256 = vpop.f32.mrf.mxu0
  %v257 = vpop.f32.mrf.mxu0
  %v258 = vadd.f32 0.0, %v257
  %v259 = vpop.f32.mrf.mxu0
  %260 = vmatprep.mubr.bf16.mxu0 0
  %261 = vmatmul.mubr.bf16.gmra.mxu0 %v154
  %v262 = vpop.f32.mrf.mxu0
  %v263 = vadd.f32 0.0, %v262
  %v264 = vpop.f32.mrf.mxu0
  %v265 = vpop.f32.mrf.mxu0
  %v266 = vadd.f32 0.0, %v265
  %v267 = vpop.f32.mrf.mxu0
  %268 = vdwg.mxu0
  %v285 = vunpack.c.l.b16 %v137
  %v286 = vunpack.c.l.b16 %v138
  %v287 = vunpack.c.l.b16 %v139
  %v288 = vunpack.c.l.b16 %v140
  %v289 = vunpack.c.l.b16 %v141
  %v290 = vunpack.c.l.b16 %v142
  %v291 = vunpack.c.l.b16 %v143
  %v292 = vunpack.c.l.b16 %v144
  %v293 = vunpack.c.l.b16 %v145
  %v294 = vunpack.c.l.b16 %v146
  %v295 = vunpack.c.l.b16 %v147
  %v296 = vunpack.c.l.b16 %v148
  %v297 = vunpack.c.l.b16 %v149
  %v298 = vunpack.c.l.b16 %v150
  %v299 = vunpack.c.l.b16 %v151
  %v300 = vunpack.c.l.b16 %v152
  %v301 = vpack.c.b16 %v286, %v285
  %v302 = vpack.c.b16 %v288, %v287
  %v303 = vpack.c.b16 %v290, %v289
  %v304 = vpack.c.b16 %v292, %v291
  %v305 = vpack.c.b16 %v294, %v293
  %v306 = vpack.c.b16 %v296, %v295
  %v307 = vpack.c.b16 %v298, %v297
  %v308 = vpack.c.b16 %v300, %v299
  %317 = vmatprep.subr.bf16.mxu0 0
  %318 = vmatpush1.bf16.msra.mxu0 %v308
  %319 = vmatprep.subr.bf16.mxu0 0
  %320 = vmatpush1.bf16.msra.mxu0 %v307
  %321 = vmatprep.subr.bf16.mxu0 0
  %322 = vmatpush1.bf16.msra.mxu0 %v306
  %323 = vmatprep.subr.bf16.mxu0 0
  %324 = vmatpush1.bf16.msra.mxu0 %v305
  %325 = vmatprep.subr.bf16.mxu0 0
  %326 = vmatpush1.bf16.msra.mxu0 %v304
  %327 = vmatprep.subr.bf16.mxu0 0
  %328 = vmatpush1.bf16.msra.mxu0 %v303
  %329 = vmatprep.subr.bf16.mxu0 0
  %330 = vmatpush1.bf16.msra.mxu0 %v302
  %331 = vmatprep.subr.bf16.mxu0 0
  %332 = vmatpush1.bf16.msra.mxu0 %v301
  %333 = vmatprep.subr.bf16.mxu0 0
  %334 = vmatpush2.bf16.msra.mxu0 0
  %335 = vmatprep.subr.bf16.mxu0 0
  %336 = vmatpush2.bf16.msra.mxu0 0
  %337 = vmatprep.subr.bf16.mxu0 0
  %338 = vmatpush2.bf16.msra.mxu0 0
  %339 = vmatprep.subr.bf16.mxu0 0
  %340 = vmatpush2.bf16.msra.mxu0 0
  %341 = vmatprep.subr.bf16.mxu0 0
  %342 = vmatpush2.bf16.msra.mxu0 0
  %343 = vmatprep.subr.bf16.mxu0 0
  %344 = vmatpush2.bf16.msra.mxu0 0
  %345 = vmatprep.subr.bf16.mxu0 0
  %346 = vmatpush2.bf16.msra.mxu0 0
  %347 = vmatprep.subr.bf16.mxu0 0
  %348 = vmatpush2.bf16.msra.mxu0 0
  %349 = vmatprep.mubr.bf16.mxu0 0
  %350 = vmatmul.mubr.bf16.gmra.mxu0 %v135
  %v351 = vpop.f32.mrf.mxu0
  %v352 = vadd.f32 %v255, %v351
  %v353 = vpop.f32.mrf.mxu0
  %v354 = vpop.f32.mrf.mxu0
  %v355 = vadd.f32 %v258, %v354
  %v356 = vpop.f32.mrf.mxu0
  %357 = vmatprep.mubr.bf16.mxu0 0
  %358 = vmatmul.mubr.bf16.gmra.mxu0 %v136
  %v359 = vpop.f32.mrf.mxu0
  %v360 = vadd.f32 %v263, %v359
  %v361 = vpop.f32.mrf.mxu0
  %v362 = vpop.f32.mrf.mxu0
  %v363 = vadd.f32 %v266, %v362
  %v364 = vpop.f32.mrf.mxu0
  %365 = vdwg.mxu0
  %v366 = vpack.c.bf16 %v132, %v131
  %v367 = vpack.c.bf16 %v134, %v133
  %s368 = scalar_lea.vmem %s3, 128
  %v369 = vld [vmem:[%s368] sm:$0xf]
  %v370 = vld [vmem:[%s368 + $0x4] sm:$0xf]
  %v371 = vld [vmem:[%s368 + $0x8] sm:$0xf]
  %v372 = vld [vmem:[%s368 + $0xc] sm:$0xf]
  %v373 = vld [vmem:[%s368 + $0x10] sm:$0xf]
  %v374 = vld [vmem:[%s368 + $0x14] sm:$0xf]
  %v375 = vld [vmem:[%s368 + $0x18] sm:$0xf]
  %v376 = vld [vmem:[%s368 + $0x1c] sm:$0xf]
  %v377 = vld [vmem:[%s368 + $0x20] sm:$0xf]
  %v378 = vld [vmem:[%s368 + $0x24] sm:$0xf]
  %v379 = vld [vmem:[%s368 + $0x28] sm:$0xf]
  %v380 = vld [vmem:[%s368 + $0x2c] sm:$0xf]
  %v381 = vld [vmem:[%s368 + $0x30] sm:$0xf]
  %v382 = vld [vmem:[%s368 + $0x34] sm:$0xf]
  %v383 = vld [vmem:[%s368 + $0x38] sm:$0xf]
  %v384 = vld [vmem:[%s368 + $0x3c] sm:$0xf]
  %v401 = vunpack.c.l.b16 %v369
  %v402 = vunpack.c.l.b16 %v370
  %v403 = vunpack.c.l.b16 %v371
  %v404 = vunpack.c.l.b16 %v372
  %v405 = vunpack.c.l.b16 %v373
  %v406 = vunpack.c.l.b16 %v374
  %v407 = vunpack.c.l.b16 %v375
  %v408 = vunpack.c.l.b16 %v376
  %v409 = vunpack.c.l.b16 %v377
  %v410 = vunpack.c.l.b16 %v378
  %v411 = vunpack.c.l.b16 %v379
  %v412 = vunpack.c.l.b16 %v380
  %v413 = vunpack.c.l.b16 %v381
  %v414 = vunpack.c.l.b16 %v382
  %v415 = vunpack.c.l.b16 %v383
  %v416 = vunpack.c.l.b16 %v384
  %v417 = vpack.c.b16 %v402, %v401
  %v418 = vpack.c.b16 %v404, %v403
  %v419 = vpack.c.b16 %v406, %v405
  %v420 = vpack.c.b16 %v408, %v407
  %v421 = vpack.c.b16 %v410, %v409
  %v422 = vpack.c.b16 %v412, %v411
  %v423 = vpack.c.b16 %v414, %v413
  %v424 = vpack.c.b16 %v416, %v415
  %433 = vmatprep.subr.bf16.mxu0 0
  %434 = vmatpush1.bf16.msra.mxu0 %v424
  %435 = vmatprep.subr.bf16.mxu0 0
  %436 = vmatpush1.bf16.msra.mxu0 %v423
  %437 = vmatprep.subr.bf16.mxu0 0
  %438 = vmatpush1.bf16.msra.mxu0 %v422
  %439 = vmatprep.subr.bf16.mxu0 0
  %440 = vmatpush1.bf16.msra.mxu0 %v421
  %441 = vmatprep.subr.bf16.mxu0 0
  %442 = vmatpush1.bf16.msra.mxu0 %v420
  %443 = vmatprep.subr.bf16.mxu0 0
  %444 = vmatpush1.bf16.msra.mxu0 %v419
  %445 = vmatprep.subr.bf16.mxu0 0
  %446 = vmatpush1.bf16.msra.mxu0 %v418
  %447 = vmatprep.subr.bf16.mxu0 0
  %448 = vmatpush1.bf16.msra.mxu0 %v417
  %449 = vmatprep.subr.bf16.mxu0 0
  %450 = vmatpush2.bf16.msra.mxu0 0
  %451 = vmatprep.subr.bf16.mxu0 0
  %452 = vmatpush2.bf16.msra.mxu0 0
  %453 = vmatprep.subr.bf16.mxu0 0
  %454 = vmatpush2.bf16.msra.mxu0 0
  %455 = vmatprep.subr.bf16.mxu0 0
  %456 = vmatpush2.bf16.msra.mxu0 0
  %457 = vmatprep.subr.bf16.mxu0 0
  %458 = vmatpush2.bf16.msra.mxu0 0
  %459 = vmatprep.subr.bf16.mxu0 0
  %460 = vmatpush2.bf16.msra.mxu0 0
  %461 = vmatprep.subr.bf16.mxu0 0
  %462 = vmatpush2.bf16.msra.mxu0 0
  %463 = vmatprep.subr.bf16.mxu0 0
  %464 = vmatpush2.bf16.msra.mxu0 0
  %465 = vmatprep.mubr.bf16.mxu0 0
  %466 = vmatmul.mubr.bf16.gmra.mxu0 %v366
  %v467 = vpop.f32.mrf.mxu0
  %v468 = vadd.f32 0.0, %v467
  %v469 = vpop.f32.mrf.mxu0
  %v470 = vpop.f32.mrf.mxu0
  %v471 = vadd.f32 0.0, %v470
  %v472 = vpop.f32.mrf.mxu0
  %473 = vmatprep.mubr.bf16.mxu0 0
  %474 = vmatmul.mubr.bf16.gmra.mxu0 %v367
  %v475 = vpop.f32.mrf.mxu0
  %v476 = vadd.f32 0.0, %v475
  %v477 = vpop.f32.mrf.mxu0
  %v478 = vpop.f32.mrf.mxu0
  %v479 = vadd.f32 0.0, %v478
  %v480 = vpop.f32.mrf.mxu0
  %481 = vdwg.mxu0
  %v482 = vadd.f32 %v352, %v468
  %v483 = vadd.f32 %v355, %v471
  %v484 = vadd.f32 %v360, %v476
  %v485 = vadd.f32 %v363, %v479
  %v486 = vmax.f32 %v482, 0.0
  %v487 = vmax.f32 %v483, 0.0
  %v488 = vmax.f32 %v484, 0.0
  %v489 = vmax.f32 %v485, 0.0
  %490 = vst [vmem:[%s4] sm:$0xff] %v486
  %491 = vst [vmem:[%s4 + $0x8] sm:$0xff] %v487
  %492 = vst [vmem:[%s4 + $0x10] sm:$0xff] %v488
  %493 = vst [vmem:[%s4 + $0x18] sm:$0xff] %v489
  // Predicated region
  $region18: #{convblock_forward.5} parent=0 // pred_check
    _
  $region19: #{convblock_forward.5} parent=0 // pred_check_branch
    %495 = sbr.rel (0) target = $region21
  $region20: #{convblock_forward.5} parent=0 // pred_region
    _
  $region21: #{convblock_forward.5} parent=0 // pred_fallthru
    _
  // Predicated region
  $region22: #{convblock_forward.5} parent=0 // pred_check
    _
  $region23: #{convblock_forward.5} parent=0 // pred_check_branch
    %497 = sbr.rel (0) target = $region25
  $region24: #{convblock_forward.5} parent=0 // pred_region
    _
  $region25: #{convblock_forward.5} parent=0 // pred_fallthru
    _

</llo_original>
